<compile_context>
chip_gen: v6e
topology: v6e:2x2x1
jax: 0.10.0
libtpu: 0.0.40
codegen_flags: <defaults>
</compile_context>

<pallas_src>
import math
from functools import partial

import jax
import jax.numpy as jnp
from jax import lax
from jax.experimental import pallas as pl
from jax.experimental.pallas import tpu as pltpu


# ----------------------------- config ---------------------------------------
CFG = dict(emb_dim=32, context_length=8, n_heads=4, drop_rate=0.0, qkv_bias=False)


# ----------------------------- kernel helpers --------------------------------
def _layernorm(x, scale, shift, eps=1e-5):
    # x: (N, E), scale/shift: (1, E); biased variance (matches torch unbiased=False)
    mean = jnp.mean(x, axis=-1, keepdims=True)
    var = jnp.mean(jnp.square(x - mean), axis=-1, keepdims=True)
    return (x - mean) * lax.rsqrt(var + eps) * scale + shift


def _gelu_tanh(x):
    c = math.sqrt(2.0 / math.pi)
    return 0.5 * x * (1.0 + jnp.tanh(c * (x + 0.044715 * x * x * x)))


# ----------------------------- kernel ----------------------------------------
def transformer_block_kernel(
    x_ref,                 # (N, E)        f32, N = B*T
    bias_ref,              # (N, N)        f32 additive attn bias (0 / -inf)
    wqkv_ref,              # (3*nH, E, hd) bf16  (W_q pre-scaled by 1/sqrt(hd))
    wo_ref,                # (nH, hd, E)   bf16
    w1_ref,                # (E, 4E)       bf16  FF up
    b1_ref,                # (1, 4E)       f32
    w2_ref,                # (4E, E)       bf16  FF down
    vec_ref,               # (8, E)        f32 packed: [g1,s1,g2,s2,bo,b2,0,0]
    o_ref,                 # (N, E)        f32
    *, num_heads,
):
    f32, bf16 = jnp.float32, jnp.bfloat16
    x = x_ref[...].astype(f32)                       # (N, E)
    N, E = x.shape
    nH = num_heads

    vecs = vec_ref[...]                               # (8, E) f32
    g1, s1 = vecs[0:1], vecs[1:2]
    g2, s2 = vecs[2:3], vecs[3:4]
    bo, b2 = vecs[4:5], vecs[5:6]

    # ---------------- LayerNorm 1 ----------------
    xn = _layernorm(x, g1, s1)

    # ---------------- QKV projections (all heads, one batched contraction) ----
    xn_b = jnp.broadcast_to(xn.astype(bf16)[None], (3 * nH, N, E))
    qkv = jnp.einsum("hne,hed->hnd", xn_b, wqkv_ref[...],
                     preferred_element_type=f32)     # (3nH, N, hd)
    q = qkv[:nH].astype(bf16)                        # already 1/sqrt(hd)-scaled
    k = qkv[nH:2 * nH].astype(bf16)
    v = qkv[2 * nH:].astype(bf16)

    # ---------------- scores / softmax / context ----------------
    # batch folded into the token dim; block-diagonal causal bias handles both
    # the causal mask and batch separation.
    scores = jnp.einsum("hqd,hkd->hqk", q, k,
                        preferred_element_type=f32)  # (nH, N, N)
    scores = scores + bias_ref[...]

    m = jnp.max(scores, axis=-1, keepdims=True)
    p = jnp.exp(scores - m)
    w = p * pl.reciprocal(jnp.sum(p, axis=-1, keepdims=True), approx=True)

    ctx = jnp.einsum("hqk,hkd->hqd", w.astype(bf16), v,
                     preferred_element_type=f32)     # (nH, N, hd)

    # ---------------- output projection (heads summed, no concat) -------------
    attn_h = jnp.einsum("hnd,hdo->hno", ctx.astype(bf16), wo_ref[...],
                        preferred_element_type=f32)  # (nH, N, E)
    attn = attn_h[0]
    for h in range(1, nH):                           # nH-1 full-tile VPU adds
        attn = attn + attn_h[h]
    attn = attn + bo

    x1 = x + attn                                    # residual 1 (dropout p=0)

    # ---------------- LayerNorm 2 + FeedForward ----------------
    x2 = _layernorm(x1, g2, s2)
    h1 = jnp.dot(x2.astype(bf16), w1_ref[...], preferred_element_type=f32) + b1_ref[...]
    h1 = _gelu_tanh(h1)
    ff = jnp.dot(h1.astype(bf16), w2_ref[...], preferred_element_type=f32) + b2

    o_ref[...] = (x1 + ff).astype(o_ref.dtype)       # residual 2 (dropout p=0)


# ----------------------------- wrapper ---------------------------------------
@partial(jax.jit, static_argnames=("num_heads",))
def transformer_block(x, params, num_heads):
    B, T, E = x.shape
    assert E % num_heads == 0
    N = B * T
    H = 4 * E
    nH = num_heads
    hd = E // nH

    x2d = x.reshape(N, E)                            # free, contiguous in HBM

    # Block-diagonal causal additive bias over the flattened (B*T) token dim.
    tok = jnp.arange(N)
    batch_id = tok // T
    masked = (tok[None, :] > tok[:, None]) | (batch_id[None, :] != batch_id[:, None])
    attn_bias = jnp.where(masked, -jnp.inf, 0.0).astype(jnp.float32)   # (N, N)

    # Restructure weights head-major in the wrapper (plain JAX, outside kernel).
    inv_sqrt_hd = 1.0 / math.sqrt(hd)
    to_heads = lambda w: w.reshape(E, nH, hd).transpose(1, 0, 2)       # (nH, E, hd)
    wqkv = jnp.concatenate(
        [to_heads(params["wq"] * inv_sqrt_hd),
         to_heads(params["wk"]),
         to_heads(params["wv"])], axis=0).astype(jnp.bfloat16)         # (3nH, E, hd)
    wo3 = params["wo"].reshape(nH, hd, E).astype(jnp.bfloat16)         # (nH, hd, E)
    w1 = params["w1"].astype(jnp.bfloat16)
    w2 = params["w2"].astype(jnp.bfloat16)

    # Pack the six small (1, E) f32 vectors into one sublane-aligned (8, E) tile.
    vecs = jnp.concatenate(
        [params["ln1_scale"], params["ln1_shift"],
         params["ln2_scale"], params["ln2_shift"],
         params["bo"], params["b2"],
         jnp.zeros((2, E), jnp.float32)], axis=0)                      # (8, E)

    full = lambda shape: pl.BlockSpec(shape, lambda i, s=shape: (0,) * len(s))
    kernel = partial(transformer_block_kernel, num_heads=nH)

    out2d = pl.pallas_call(
        kernel,
        out_shape=jax.ShapeDtypeStruct((N, E), x.dtype),
        grid_spec=pltpu.PrefetchScalarGridSpec(
            num_scalar_prefetch=0,
            grid=(1,),                               # whole batch in one step
            in_specs=[
                full((N, E)),                        # x
                full((N, N)),                        # attention bias
                full((3 * nH, E, hd)),               # Wq|Wk|Wv (head-major)
                full((nH, hd, E)),                   # Wo (head-major)
                full((E, H)),                        # FF up weight
                full((1, H)),                        # FF up bias
                full((H, E)),                        # FF down weight
                full((8, E)),                        # packed LN params / biases
            ],
            out_specs=full((N, E)),
        ),
        compiler_params=pltpu.CompilerParams(dimension_semantics=("arbitrary",)),
    )(x2d, attn_bias, wqkv, wo3, w1, params["b1"], w2, vecs)
    return out2d.reshape(B, T, E)


# ----------------------------- pure-JAX reference -----------------------------
def transformer_block_ref(x, params, num_heads):
    B, T, E = x.shape
    hd = E // num_heads

    def ln(v, g, s):
        m = v.mean(-1, keepdims=True)
        var = ((v - m) ** 2).mean(-1, keepdims=True)
        return g * (v - m) / jnp.sqrt(var + 1e-5) + s

    xn = ln(x, params["ln1_scale"], params["ln1_shift"])
    q = xn @ params["wq"]; k = xn @ params["wk"]; v = xn @ params["wv"]
    heads = lambda t: t.reshape(B, T, num_heads, hd).transpose(0, 2, 1, 3)
    qh, kh, vh = heads(q), heads(k), heads(v)
    s = qh @ kh.transpose(0, 1, 3, 2)
    mask = jnp.triu(jnp.ones((T, T), dtype=bool), k=1)
    s = jnp.where(mask, -jnp.inf, s)
    w = jax.nn.softmax(s / math.sqrt(hd), axis=-1)
    ctx = (w @ vh).transpose(0, 2, 1, 3).reshape(B, T, E)
    attn = ctx @ params["wo"] + params["bo"]
    x1 = x + attn
    x2 = ln(x1, params["ln2_scale"], params["ln2_shift"])
    h = x2 @ params["w1"] + params["b1"]
    h = _gelu_tanh(h)
    return x1 + h @ params["w2"] + params["b2"]


# ----------------------------- setup / run ------------------------------------
def init_params(key, emb_dim):
    E, H = emb_dim, 4 * emb_dim
    ks = jax.random.split(key, 8)
    std = 0.02
    return dict(
        wq=jax.random.normal(ks[0], (E, E), jnp.float32) * std,
        wk=jax.random.normal(ks[1], (E, E), jnp.float32) * std,
        wv=jax.random.normal(ks[2], (E, E), jnp.float32) * std,
        wo=jax.random.normal(ks[3], (E, E), jnp.float32) * std,
        bo=jnp.zeros((1, E), jnp.float32),
        ln1_scale=jnp.ones((1, E), jnp.float32),
        ln1_shift=jnp.zeros((1, E), jnp.float32),
        ln2_scale=jnp.ones((1, E), jnp.float32),
        ln2_shift=jnp.zeros((1, E), jnp.float32),
        w1=jax.random.normal(ks[4], (E, H), jnp.float32) * std,
        b1=jnp.zeros((1, H), jnp.float32),
        w2=jax.random.normal(ks[5], (H, E), jnp.float32) * std,
        b2=jnp.zeros((1, E), jnp.float32),
    )


if __name__ == "__main__":
    key = jax.random.PRNGKey(0)
    k_x, k_p = jax.random.split(key)

    B, T, E = 2, CFG["context_length"], CFG["emb_dim"]
    x = jax.random.normal(k_x, (B, T, E), jnp.float32)
    params = init_params(k_p, E)

    out = transformer_block(x, params, num_heads=CFG["n_heads"])
    out = jax.block_until_ready(out)

    assert out.shape == (B, T, E)
    assert jnp.all(jnp.isfinite(out))

    ref = transformer_block_ref(x, params, CFG["n_heads"])
    max_err = float(jnp.max(jnp.abs(out - ref)))
    # generous tolerance: bf16 matmul operands + approx-reciprocal softmax
    assert max_err < 3e-2, f"max abs err vs f32 reference: {max_err}"

    print("KERNEL_OK")
</pallas_src>

<mosaic_0001>
module attributes {stable_mosaic.version = 11 : i64} {
  func.func @transformer_block_kernel(%arg0: i32, %arg1: memref<16x32xf32, #tpu.memory_space<vmem>>, %arg2: memref<16x16xf32, #tpu.memory_space<vmem>>, %arg3: memref<12x32x8xbf16, #tpu.memory_space<vmem>>, %arg4: memref<4x8x32xbf16, #tpu.memory_space<vmem>>, %arg5: memref<32x128xbf16, #tpu.memory_space<vmem>>, %arg6: memref<1x128xf32, #tpu.memory_space<vmem>>, %arg7: memref<128x32xbf16, #tpu.memory_space<vmem>>, %arg8: memref<8x32xf32, #tpu.memory_space<vmem>>, %arg9: memref<16x32xf32, #tpu.memory_space<vmem>>) attributes {dimension_semantics = [#tpu.dimension_semantics<arbitrary>], iteration_bounds = array<i64: 1>, scalar_prefetch = 0 : i64, scratch_operands = 0 : i64, tpu.core_type = #tpu.core_type<tc>, window_params = [{pipeline_mode = #tpu.pipeline_mode<synchronous>, transform_indices = @transform_0, window_bounds = array<i64: 16, 32>}, {pipeline_mode = #tpu.pipeline_mode<synchronous>, transform_indices = @transform_1, window_bounds = array<i64: 16, 16>}, {pipeline_mode = #tpu.pipeline_mode<synchronous>, transform_indices = @transform_2, window_bounds = array<i64: 12, 32, 8>}, {pipeline_mode = #tpu.pipeline_mode<synchronous>, transform_indices = @transform_3, window_bounds = array<i64: 4, 8, 32>}, {pipeline_mode = #tpu.pipeline_mode<synchronous>, transform_indices = @transform_4, window_bounds = array<i64: 32, 128>}, {pipeline_mode = #tpu.pipeline_mode<synchronous>, transform_indices = @transform_5, window_bounds = array<i64: 1, 128>}, {pipeline_mode = #tpu.pipeline_mode<synchronous>, transform_indices = @transform_6, window_bounds = array<i64: 128, 32>}, {pipeline_mode = #tpu.pipeline_mode<synchronous>, transform_indices = @transform_7, window_bounds = array<i64: 8, 32>}, {pipeline_mode = #tpu.pipeline_mode<synchronous>, transform_indices = @transform_8, window_bounds = array<i64: 16, 32>}]} {
    %c0 = arith.constant 0 : index
    %c0_0 = arith.constant 0 : index
    %0 = vector.load %arg1[%c0, %c0_0] : memref<16x32xf32, #tpu.memory_space<vmem>>, vector<16x32xf32>
    %c0_1 = arith.constant 0 : index
    %c0_2 = arith.constant 0 : index
    %1 = vector.load %arg8[%c0_1, %c0_2] : memref<8x32xf32, #tpu.memory_space<vmem>>, vector<8x32xf32>
    %2 = vector.extract_strided_slice %1 {offsets = [0, 0], sizes = [1, 32], strides = [1, 1]} : vector<8x32xf32> to vector<1x32xf32>
    %3 = vector.extract_strided_slice %1 {offsets = [1, 0], sizes = [1, 32], strides = [1, 1]} : vector<8x32xf32> to vector<1x32xf32>
    %4 = vector.extract_strided_slice %1 {offsets = [2, 0], sizes = [1, 32], strides = [1, 1]} : vector<8x32xf32> to vector<1x32xf32>
    %5 = vector.extract_strided_slice %1 {offsets = [3, 0], sizes = [1, 32], strides = [1, 1]} : vector<8x32xf32> to vector<1x32xf32>
    %6 = vector.extract_strided_slice %1 {offsets = [4, 0], sizes = [1, 32], strides = [1, 1]} : vector<8x32xf32> to vector<1x32xf32>
    %7 = vector.extract_strided_slice %1 {offsets = [5, 0], sizes = [1, 32], strides = [1, 1]} : vector<8x32xf32> to vector<1x32xf32>
    %cst = arith.constant dense<0.000000e+00> : vector<16xf32>
    %8 = vector.multi_reduction <add>, %0, %cst [1] : vector<16x32xf32> to vector<16xf32>
    %9 = vector.shape_cast %8 : vector<16xf32> to vector<16x1xf32>
    %cst_3 = arith.constant 3.200000e+01 : f32
    %10 = vector.broadcast %cst_3 : f32 to vector<16x1xf32>
    %11 = arith.divf %9, %10 : vector<16x1xf32>
    %12 = vector.broadcast %11 : vector<16x1xf32> to vector<16x32xf32>
    %13 = arith.subf %0, %12 : vector<16x32xf32>
    %14 = arith.mulf %13, %13 : vector<16x32xf32>
    %cst_4 = arith.constant dense<0.000000e+00> : vector<16xf32>
    %15 = vector.multi_reduction <add>, %14, %cst_4 [1] : vector<16x32xf32> to vector<16xf32>
    %16 = vector.shape_cast %15 : vector<16xf32> to vector<16x1xf32>
    %cst_5 = arith.constant 3.200000e+01 : f32
    %17 = vector.broadcast %cst_5 : f32 to vector<16x1xf32>
    %18 = arith.divf %16, %17 : vector<16x1xf32>
    %19 = vector.broadcast %11 : vector<16x1xf32> to vector<16x32xf32>
    %20 = arith.subf %0, %19 : vector<16x32xf32>
    %cst_6 = arith.constant 9.99999974E-6 : f32
    %21 = vector.broadcast %cst_6 : f32 to vector<16x1xf32>
    %22 = arith.addf %18, %21 : vector<16x1xf32>
    %23 = math.rsqrt %22 : vector<16x1xf32>
    %24 = vector.broadcast %23 : vector<16x1xf32> to vector<16x32xf32>
    %25 = arith.mulf %20, %24 : vector<16x32xf32>
    %26 = vector.broadcast %2 : vector<1x32xf32> to vector<16x32xf32>
    %27 = arith.mulf %25, %26 : vector<16x32xf32>
    %28 = vector.broadcast %3 : vector<1x32xf32> to vector<16x32xf32>
    %29 = arith.addf %27, %28 : vector<16x32xf32>
    %30 = arith.truncf %29 : vector<16x32xf32> to vector<16x32xbf16>
    %31 = vector.shape_cast %30 : vector<16x32xbf16> to vector<1x16x32xbf16>
    %32 = vector.shape_cast %31 : vector<1x16x32xbf16> to vector<1x16x32xbf16>
    %33 = vector.broadcast %32 : vector<1x16x32xbf16> to vector<12x16x32xbf16>
    %c0_7 = arith.constant 0 : index
    %c0_8 = arith.constant 0 : index
    %c0_9 = arith.constant 0 : index
    %34 = vector.load %arg3[%c0_7, %c0_8, %c0_9] : memref<12x32x8xbf16, #tpu.memory_space<vmem>>, vector<12x32x8xbf16>
    "tpu.trace_start"() <{level = 10 : i32, message = "hne,hed->hnd"}> : () -> ()
    %cst_10 = arith.constant dense<0.000000e+00> : vector<12x16x8xf32>
    %35 = tpu.matmul %33, %34, %cst_10 {dimension_numbers = #tpu.dot_dimension_numbers<[2], [1], [1], [2], [0, 0, 0, 1, 1, 2], [0], [0]>} : vector<12x16x32xbf16>, vector<12x32x8xbf16>, vector<12x16x8xf32> -> vector<12x16x8xf32>
    "tpu.trace_stop"() : () -> ()
    %36 = vector.extract_strided_slice %35 {offsets = [0, 0, 0], sizes = [4, 16, 8], strides = [1, 1, 1]} : vector<12x16x8xf32> to vector<4x16x8xf32>
    %37 = arith.truncf %36 : vector<4x16x8xf32> to vector<4x16x8xbf16>
    %38 = vector.extract_strided_slice %35 {offsets = [4, 0, 0], sizes = [4, 16, 8], strides = [1, 1, 1]} : vector<12x16x8xf32> to vector<4x16x8xf32>
    %39 = arith.truncf %38 : vector<4x16x8xf32> to vector<4x16x8xbf16>
    %40 = vector.extract_strided_slice %35 {offsets = [8, 0, 0], sizes = [4, 16, 8], strides = [1, 1, 1]} : vector<12x16x8xf32> to vector<4x16x8xf32>
    %41 = arith.truncf %40 : vector<4x16x8xf32> to vector<4x16x8xbf16>
    "tpu.trace_start"() <{level = 10 : i32, message = "hqd,hkd->hqk"}> : () -> ()
    %cst_11 = arith.constant dense<0.000000e+00> : vector<4x16x16xf32>
    %42 = tpu.matmul %37, %39, %cst_11 {dimension_numbers = #tpu.dot_dimension_numbers<[2], [2], [1], [1], [0, 0, 0, 1, 1, 1], [0], [0]>} : vector<4x16x8xbf16>, vector<4x16x8xbf16>, vector<4x16x16xf32> -> vector<4x16x16xf32>
    "tpu.trace_stop"() : () -> ()
    %c0_12 = arith.constant 0 : index
    %c0_13 = arith.constant 0 : index
    %43 = vector.load %arg2[%c0_12, %c0_13] : memref<16x16xf32, #tpu.memory_space<vmem>>, vector<16x16xf32>
    %44 = vector.shape_cast %43 : vector<16x16xf32> to vector<1x16x16xf32>
    %45 = vector.broadcast %44 : vector<1x16x16xf32> to vector<4x16x16xf32>
    %46 = arith.addf %42, %45 : vector<4x16x16xf32>
    %cst_14 = arith.constant dense<0xFF800000> : vector<4x16xf32>
    %47 = vector.multi_reduction <maximumf>, %46, %cst_14 [2] : vector<4x16x16xf32> to vector<4x16xf32>
    %48 = vector.shape_cast %47 : vector<4x16xf32> to vector<4x16x1xf32>
    %49 = vector.broadcast %48 : vector<4x16x1xf32> to vector<4x16x16xf32>
    %50 = arith.subf %46, %49 : vector<4x16x16xf32>
    %51 = math.exp %50 : vector<4x16x16xf32>
    %cst_15 = arith.constant dense<0.000000e+00> : vector<4x16xf32>
    %52 = vector.multi_reduction <add>, %51, %cst_15 [2] : vector<4x16x16xf32> to vector<4x16xf32>
    %53 = vector.shape_cast %52 : vector<4x16xf32> to vector<4x16x1xf32>
    %54 = tpu.reciprocal %53 {approx = true} : vector<4x16x1xf32> -> vector<4x16x1xf32>
    %55 = vector.broadcast %54 : vector<4x16x1xf32> to vector<4x16x16xf32>
    %56 = arith.mulf %51, %55 : vector<4x16x16xf32>
    %57 = arith.truncf %56 : vector<4x16x16xf32> to vector<4x16x16xbf16>
    "tpu.trace_start"() <{level = 10 : i32, message = "hqk,hkd->hqd"}> : () -> ()
    %cst_16 = arith.constant dense<0.000000e+00> : vector<4x16x8xf32>
    %58 = tpu.matmul %57, %41, %cst_16 {dimension_numbers = #tpu.dot_dimension_numbers<[2], [1], [1], [2], [0, 0, 0, 1, 1, 2], [0], [0]>} : vector<4x16x16xbf16>, vector<4x16x8xbf16>, vector<4x16x8xf32> -> vector<4x16x8xf32>
    "tpu.trace_stop"() : () -> ()
    %59 = arith.truncf %58 : vector<4x16x8xf32> to vector<4x16x8xbf16>
    %c0_17 = arith.constant 0 : index
    %c0_18 = arith.constant 0 : index
    %c0_19 = arith.constant 0 : index
    %60 = vector.load %arg4[%c0_17, %c0_18, %c0_19] : memref<4x8x32xbf16, #tpu.memory_space<vmem>>, vector<4x8x32xbf16>
    "tpu.trace_start"() <{level = 10 : i32, message = "hnd,hdo->hno"}> : () -> ()
    %cst_20 = arith.constant dense<0.000000e+00> : vector<4x16x32xf32>
    %61 = tpu.matmul %59, %60, %cst_20 {dimension_numbers = #tpu.dot_dimension_numbers<[2], [1], [1], [2], [0, 0, 0, 1, 1, 2], [0], [0]>} : vector<4x16x8xbf16>, vector<4x8x32xbf16>, vector<4x16x32xf32> -> vector<4x16x32xf32>
    "tpu.trace_stop"() : () -> ()
    %62 = vector.extract_strided_slice %61 {offsets = [0, 0, 0], sizes = [1, 16, 32], strides = [1, 1, 1]} : vector<4x16x32xf32> to vector<1x16x32xf32>
    %63 = vector.shape_cast %62 : vector<1x16x32xf32> to vector<16x32xf32>
    %64 = vector.extract_strided_slice %61 {offsets = [1, 0, 0], sizes = [1, 16, 32], strides = [1, 1, 1]} : vector<4x16x32xf32> to vector<1x16x32xf32>
    %65 = vector.shape_cast %64 : vector<1x16x32xf32> to vector<16x32xf32>
    %66 = arith.addf %63, %65 : vector<16x32xf32>
    %67 = vector.extract_strided_slice %61 {offsets = [2, 0, 0], sizes = [1, 16, 32], strides = [1, 1, 1]} : vector<4x16x32xf32> to vector<1x16x32xf32>
    %68 = vector.shape_cast %67 : vector<1x16x32xf32> to vector<16x32xf32>
    %69 = arith.addf %66, %68 : vector<16x32xf32>
    %70 = vector.extract_strided_slice %61 {offsets = [3, 0, 0], sizes = [1, 16, 32], strides = [1, 1, 1]} : vector<4x16x32xf32> to vector<1x16x32xf32>
    %71 = vector.shape_cast %70 : vector<1x16x32xf32> to vector<16x32xf32>
    %72 = arith.addf %69, %71 : vector<16x32xf32>
    %73 = vector.broadcast %6 : vector<1x32xf32> to vector<16x32xf32>
    %74 = arith.addf %72, %73 : vector<16x32xf32>
    %75 = arith.addf %0, %74 : vector<16x32xf32>
    %cst_21 = arith.constant dense<0.000000e+00> : vector<16xf32>
    %76 = vector.multi_reduction <add>, %75, %cst_21 [1] : vector<16x32xf32> to vector<16xf32>
    %77 = vector.shape_cast %76 : vector<16xf32> to vector<16x1xf32>
    %cst_22 = arith.constant 3.200000e+01 : f32
    %78 = vector.broadcast %cst_22 : f32 to vector<16x1xf32>
    %79 = arith.divf %77, %78 : vector<16x1xf32>
    %80 = vector.broadcast %79 : vector<16x1xf32> to vector<16x32xf32>
    %81 = arith.subf %75, %80 : vector<16x32xf32>
    %82 = arith.mulf %81, %81 : vector<16x32xf32>
    %cst_23 = arith.constant dense<0.000000e+00> : vector<16xf32>
    %83 = vector.multi_reduction <add>, %82, %cst_23 [1] : vector<16x32xf32> to vector<16xf32>
    %84 = vector.shape_cast %83 : vector<16xf32> to vector<16x1xf32>
    %cst_24 = arith.constant 3.200000e+01 : f32
    %85 = vector.broadcast %cst_24 : f32 to vector<16x1xf32>
    %86 = arith.divf %84, %85 : vector<16x1xf32>
    %87 = vector.broadcast %79 : vector<16x1xf32> to vector<16x32xf32>
    %88 = arith.subf %75, %87 : vector<16x32xf32>
    %cst_25 = arith.constant 9.99999974E-6 : f32
    %89 = vector.broadcast %cst_25 : f32 to vector<16x1xf32>
    %90 = arith.addf %86, %89 : vector<16x1xf32>
    %91 = math.rsqrt %90 : vector<16x1xf32>
    %92 = vector.broadcast %91 : vector<16x1xf32> to vector<16x32xf32>
    %93 = arith.mulf %88, %92 : vector<16x32xf32>
    %94 = vector.broadcast %4 : vector<1x32xf32> to vector<16x32xf32>
    %95 = arith.mulf %93, %94 : vector<16x32xf32>
    %96 = vector.broadcast %5 : vector<1x32xf32> to vector<16x32xf32>
    %97 = arith.addf %95, %96 : vector<16x32xf32>
    %98 = arith.truncf %97 : vector<16x32xf32> to vector<16x32xbf16>
    %c0_26 = arith.constant 0 : index
    %c0_27 = arith.constant 0 : index
    %99 = vector.load %arg5[%c0_26, %c0_27] : memref<32x128xbf16, #tpu.memory_space<vmem>>, vector<32x128xbf16>
    %cst_28 = arith.constant dense<0.000000e+00> : vector<16x128xf32>
    %100 = tpu.matmul %98, %99, %cst_28 {dimension_numbers = #tpu.dot_dimension_numbers<[1], [0], [0], [1], [0, 0, 1, 1], [], []>} : vector<16x32xbf16>, vector<32x128xbf16>, vector<16x128xf32> -> vector<16x128xf32>
    %c0_29 = arith.constant 0 : index
    %c0_30 = arith.constant 0 : index
    %101 = vector.load %arg6[%c0_29, %c0_30] : memref<1x128xf32, #tpu.memory_space<vmem>>, vector<1x128xf32>
    %102 = vector.broadcast %101 : vector<1x128xf32> to vector<16x128xf32>
    %103 = arith.addf %100, %102 : vector<16x128xf32>
    %cst_31 = arith.constant 5.000000e-01 : f32
    %104 = vector.broadcast %cst_31 : f32 to vector<16x128xf32>
    %105 = arith.mulf %104, %103 : vector<16x128xf32>
    %cst_32 = arith.constant 4.471500e-02 : f32
    %106 = vector.broadcast %cst_32 : f32 to vector<16x128xf32>
    %107 = arith.mulf %106, %103 : vector<16x128xf32>
    %108 = arith.mulf %107, %103 : vector<16x128xf32>
    %109 = arith.mulf %108, %103 : vector<16x128xf32>
    %110 = arith.addf %103, %109 : vector<16x128xf32>
    %cst_33 = arith.constant 0.797884583 : f32
    %111 = vector.broadcast %cst_33 : f32 to vector<16x128xf32>
    %112 = arith.mulf %111, %110 : vector<16x128xf32>
    %113 = math.tanh %112 : vector<16x128xf32>
    %cst_34 = arith.constant 1.000000e+00 : f32
    %114 = vector.broadcast %cst_34 : f32 to vector<16x128xf32>
    %115 = arith.addf %114, %113 : vector<16x128xf32>
    %116 = arith.mulf %105, %115 : vector<16x128xf32>
    %117 = arith.truncf %116 : vector<16x128xf32> to vector<16x128xbf16>
    %c0_35 = arith.constant 0 : index
    %c0_36 = arith.constant 0 : index
    %118 = vector.load %arg7[%c0_35, %c0_36] : memref<128x32xbf16, #tpu.memory_space<vmem>>, vector<128x32xbf16>
    %cst_37 = arith.constant dense<0.000000e+00> : vector<16x32xf32>
    %119 = tpu.matmul %117, %118, %cst_37 {dimension_numbers = #tpu.dot_dimension_numbers<[1], [0], [0], [1], [0, 0, 1, 1], [], []>} : vector<16x128xbf16>, vector<128x32xbf16>, vector<16x32xf32> -> vector<16x32xf32>
    %120 = vector.broadcast %7 : vector<1x32xf32> to vector<16x32xf32>
    %121 = arith.addf %119, %120 : vector<16x32xf32>
    %122 = arith.addf %75, %121 : vector<16x32xf32>
    %c0_38 = arith.constant 0 : index
    %c0_39 = arith.constant 0 : index
    %123 = vector.load %arg9[%c0_38, %c0_39] : memref<16x32xf32, #tpu.memory_space<vmem>>, vector<16x32xf32>
    tpu.vector_store %arg9[%c0_38, %c0_39], %122 {strides = array<i32>} : memref<16x32xf32, #tpu.memory_space<vmem>>, vector<16x32xf32>,
    return
  }
  func.func @transform_0(%arg0: i32) -> (i32, i32) {
    %c0_i32 = arith.constant 0 : i32
    %c0_i32_0 = arith.constant 0 : i32
    %c0_i32_1 = arith.constant 0 : i32
    return %c0_i32, %c0_i32_0 : i32, i32
  }
  func.func @transform_1(%arg0: i32) -> (i32, i32) {
    %c0_i32 = arith.constant 0 : i32
    %c0_i32_0 = arith.constant 0 : i32
    %c0_i32_1 = arith.constant 0 : i32
    return %c0_i32, %c0_i32_0 : i32, i32
  }
  func.func @transform_2(%arg0: i32) -> (i32, i32, i32) {
    %c0_i32 = arith.constant 0 : i32
    %c0_i32_0 = arith.constant 0 : i32
    %c0_i32_1 = arith.constant 0 : i32
    %c0_i32_2 = arith.constant 0 : i32
    return %c0_i32, %c0_i32_0, %c0_i32_1 : i32, i32, i32
  }
  func.func @transform_3(%arg0: i32) -> (i32, i32, i32) {
    %c0_i32 = arith.constant 0 : i32
    %c0_i32_0 = arith.constant 0 : i32
    %c0_i32_1 = arith.constant 0 : i32
    %c0_i32_2 = arith.constant 0 : i32
    return %c0_i32, %c0_i32_0, %c0_i32_1 : i32, i32, i32
  }
  func.func @transform_4(%arg0: i32) -> (i32, i32) {
    %c0_i32 = arith.constant 0 : i32
    %c0_i32_0 = arith.constant 0 : i32
    %c0_i32_1 = arith.constant 0 : i32
    return %c0_i32, %c0_i32_0 : i32, i32
  }
  func.func @transform_5(%arg0: i32) -> (i32, i32) {
    %c0_i32 = arith.constant 0 : i32
    %c0_i32_0 = arith.constant 0 : i32
    %c0_i32_1 = arith.constant 0 : i32
    return %c0_i32, %c0_i32_0 : i32, i32
  }
  func.func @transform_6(%arg0: i32) -> (i32, i32) {
    %c0_i32 = arith.constant 0 : i32
    %c0_i32_0 = arith.constant 0 : i32
    %c0_i32_1 = arith.constant 0 : i32
    return %c0_i32, %c0_i32_0 : i32, i32
  }
  func.func @transform_7(%arg0: i32) -> (i32, i32) {
    %c0_i32 = arith.constant 0 : i32
    %c0_i32_0 = arith.constant 0 : i32
    %c0_i32_1 = arith.constant 0 : i32
    return %c0_i32, %c0_i32_0 : i32, i32
  }
  func.func @transform_8(%arg0: i32) -> (i32, i32) {
    %c0_i32 = arith.constant 0 : i32
    %c0_i32_0 = arith.constant 0 : i32
    %c0_i32_1 = arith.constant 0 : i32
    return %c0_i32, %c0_i32_0 : i32, i32
  }
}

</mosaic_0001>

<llo_original>
// kernel: transformer_block.1
$region0: #{transformer_block.1}
  #allocation0 [shape = 'u32[]', space=smem, size = 0x4, offset = 0x4, fixed_abs, tag = 'smem constant byte address 0x4 - core index']
  #allocation1 [shape = 'u32[144,128]{1,0:T(1,128)}', space=vmem, size = 0x12000, scoped, tag = 'internal scratch']
  %s0 = inlined_call_operand.vmem [shape: f32[16,32], index: 0, kind: input, shape index: {}]
  %s1 = inlined_call_operand.vmem [shape: f32[16,16], index: 1, kind: input, shape index: {}]
  %s2 = inlined_call_operand.vmem [shape: bf16[12,32,8], index: 2, kind: input, shape index: {}]
  %s3 = inlined_call_operand.vmem [shape: bf16[4,8,32], index: 3, kind: input, shape index: {}]
  %s4 = inlined_call_operand.vmem [shape: bf16[32,128], index: 4, kind: input, shape index: {}]
  %s5 = inlined_call_operand.vmem [shape: f32[1,128], index: 5, kind: input, shape index: {}]
  %s6 = inlined_call_operand.vmem [shape: bf16[128,32], index: 6, kind: input, shape index: {}]
  %s7 = inlined_call_operand.vmem [shape: f32[8,32], index: 7, kind: input, shape index: {}]
  %s8 = inlined_call_operand.hbm [shape: f32[16,32], index: 8, kind: output, shape index: {}]
  %s9 = sld [smem:[#allocation0]]
  $region42: #{transformer_block.1} parent=0
    _
  %s11 = ssub.s32 1, %s9
  %s12 = scalar_select 0, %s11, %s9
  $region1: #{transformer_block.1} parent=0
    #allocation2 [shape = 'u8[8192]{0}', space=vmem, size = 0x2000, scoped, tag = 'output window, operand 0, single buffered']
    #allocation3 [shape = 's32[1]{0}', space=sflag, size = 0x4, scoped, tag = 'scoped memory for transformer_block.1']
    %13 = vsyncpa [#allocation3], 0
    // Predicated region
    $region2: #{transformer_block.1} parent=1 // pred_check
      _
    $region3: #{transformer_block.1} parent=1 // pred_check_branch
      %15 = sbr.rel (0) target = $region5
    $region4: #{transformer_block.1} parent=1 // pred_region
      _
    $region5: #{transformer_block.1} parent=1 // pred_fallthru
      _
    // Predicated region
    $region6: #{transformer_block.1} parent=1 // pred_check
      _
    $region7: #{transformer_block.1} parent=1 // pred_check_branch
      %17 = sbr.rel (0) target = $region9
    $region8: #{transformer_block.1} parent=1 // pred_region
      _
    $region9: #{transformer_block.1} parent=1 // pred_fallthru
      _
    // Predicated region
    $region10: #{transformer_block.1} parent=1 // pred_check
      _
    $region11: #{transformer_block.1} parent=1 // pred_check_branch
      %19 = sbr.rel (0) target = $region13
    $region12: #{transformer_block.1} parent=1 // pred_region
      _
    $region13: #{transformer_block.1} parent=1 // pred_fallthru
      _
    // Predicated region
    $region14: #{transformer_block.1} parent=1 // pred_check
      _
    $region15: #{transformer_block.1} parent=1 // pred_check_branch
      %21 = sbr.rel (0) target = $region17
    $region16: #{transformer_block.1} parent=1 // pred_region
      _
    $region17: #{transformer_block.1} parent=1 // pred_fallthru
      _
    // Predicated region
    $region18: #{transformer_block.1} parent=1 // pred_check
      _
    $region19: #{transformer_block.1} parent=1 // pred_check_branch
      %23 = sbr.rel (0) target = $region21
    $region20: #{transformer_block.1} parent=1 // pred_region
      _
    $region21: #{transformer_block.1} parent=1 // pred_fallthru
      _
    // Predicated region
    $region22: #{transformer_block.1} parent=1 // pred_check
      _
    $region23: #{transformer_block.1} parent=1 // pred_check_branch
      %25 = sbr.rel (0) target = $region25
    $region24: #{transformer_block.1} parent=1 // pred_region
      _
    $region25: #{transformer_block.1} parent=1 // pred_fallthru
      _
    // Predicated region
    $region26: #{transformer_block.1} parent=1 // pred_check
      _
    $region27: #{transformer_block.1} parent=1 // pred_check_branch
      %27 = sbr.rel (0) target = $region29
    $region28: #{transformer_block.1} parent=1 // pred_region
      _
    $region29: #{transformer_block.1} parent=1 // pred_fallthru
      _
    // Predicated region
    $region30: #{transformer_block.1} parent=1 // pred_check
      _
    $region31: #{transformer_block.1} parent=1 // pred_check_branch
      %29 = sbr.rel (0) target = $region33
    $region32: #{transformer_block.1} parent=1 // pred_region
      _
    $region33: #{transformer_block.1} parent=1 // pred_fallthru
      _
    %v31 = vld [vmem:[%s0] sm:$0xff]
    %v32 = vld [vmem:[%s0 + $0x8] sm:$0xff]
    %v33 = vld [vmem:[%s7] sm:$0xff]
    %vm34 = vcmask 261120
    %v35 = vsel %vm34, %v31, 0.0
    %36 = vadd.xlane.f32.xlu0 %v35
    %v37 = vpop.xlane.xlu0 %36
    %v38 = vsel %vm34, %v32, 0.0
    %39 = vadd.xlane.f32.xlu0 %v38
    %v40 = vpop.xlane.xlu0 %39
    %v41 = vrcp.pop 32.0
    %v42 = vmul.f32 %v37, %v41
    %v43 = vmul.f32 %v40, %v41
    %v44 = vsub.f32 %v31, %v42
    %v45 = vsub.f32 %v32, %v43
    %v46 = vmul.f32 %v44, %v44
    %v47 = vmul.f32 %v45, %v45
    %v48 = vsel %vm34, %v46, 0.0
    %49 = vadd.xlane.f32.xlu0 %v48
    %v50 = vpop.xlane.xlu0 %49
    %v51 = vsel %vm34, %v47, 0.0
    %52 = vadd.xlane.f32.xlu0 %v51
    %v53 = vpop.xlane.xlu0 %52
    %v54 = vmul.f32 %v50, %v41
    %v55 = vmul.f32 %v53, %v41
    %v56 = vadd.f32 %v54, 1e-05
    %v57 = vadd.f32 %v55, 1e-05
    %v58 = vrsqrt.pop %v56
    %v59 = vrsqrt.pop %v57
    %v60 = vmul.f32 %v44, %v58
    %v61 = vmul.f32 %v45, %v59
    %v62 = vlaneseq
    %v63 = vshrl.u32 %v62, 7
    %v64 = vsub.s32 0, %v63
    %v65 = vrot.slane %v33, %v64
    %v66 = vmul.f32 %v60, %v65
    %v67 = vmul.f32 %v61, %v65
    %v68 = vlaneseq
    %v69 = vshrl.u32 %v68, 7
    %v70 = vsub.s32 1, %v69
    %v71 = vrot.slane %v33, %v70
    %v72 = vadd.f32 %v66, %v71
    %v73 = vadd.f32 %v67, %v71
    %v74 = vpack.c.bf16 %v73, %v72
    %v75 = vld [vmem:[%s2] sm:$0xf]
    %v76 = vld [vmem:[%s2 + $0x4] sm:$0xf]
    %v77 = vld [vmem:[%s2 + $0x8] sm:$0xf]
    %v78 = vld [vmem:[%s2 + $0xc] sm:$0xf]
    %v79 = vld [vmem:[%s2 + $0x10] sm:$0xf]
    %v80 = vld [vmem:[%s2 + $0x14] sm:$0xf]
    %v81 = vld [vmem:[%s2 + $0x18] sm:$0xf]
    %v82 = vld [vmem:[%s2 + $0x1c] sm:$0xf]
    %v83 = vld [vmem:[%s2 + $0x20] sm:$0xf]
    %v84 = vld [vmem:[%s2 + $0x24] sm:$0xf]
    %v85 = vld [vmem:[%s2 + $0x28] sm:$0xf]
    %v86 = vld [vmem:[%s2 + $0x2c] sm:$0xf]
    %v87 = vld [vmem:[%s2 + $0x30] sm:$0xf]
    %v88 = vld [vmem:[%s2 + $0x34] sm:$0xf]
    %v89 = vld [vmem:[%s2 + $0x38] sm:$0xf]
    %v90 = vld [vmem:[%s2 + $0x3c] sm:$0xf]
    %v91 = vld [vmem:[%s2 + $0x40] sm:$0xf]
    %v92 = vld [vmem:[%s2 + $0x44] sm:$0xf]
    %v93 = vld [vmem:[%s2 + $0x48] sm:$0xf]
    %v94 = vld [vmem:[%s2 + $0x4c] sm:$0xf]
    %v95 = vld [vmem:[%s2 + $0x50] sm:$0xf]
    %v96 = vld [vmem:[%s2 + $0x54] sm:$0xf]
    %v97 = vld [vmem:[%s2 + $0x58] sm:$0xf]
    %v98 = vld [vmem:[%s2 + $0x5c] sm:$0xf]
    %v99 = vld [vmem:[%s2 + $0x60] sm:$0xf]
    %v100 = vld [vmem:[%s2 + $0x64] sm:$0xf]
    %v101 = vld [vmem:[%s2 + $0x68] sm:$0xf]
    %v102 = vld [vmem:[%s2 + $0x6c] sm:$0xf]
    %v103 = vld [vmem:[%s2 + $0x70] sm:$0xf]
    %v104 = vld [vmem:[%s2 + $0x74] sm:$0xf]
    %v105 = vld [vmem:[%s2 + $0x78] sm:$0xf]
    %v106 = vld [vmem:[%s2 + $0x7c] sm:$0xf]
    %v107 = vld [vmem:[%s2 + $0x80] sm:$0xf]
    %v108 = vld [vmem:[%s2 + $0x84] sm:$0xf]
    %v109 = vld [vmem:[%s2 + $0x88] sm:$0xf]
    %v110 = vld [vmem:[%s2 + $0x8c] sm:$0xf]
    %v111 = vld [vmem:[%s2 + $0x90] sm:$0xf]
    %v112 = vld [vmem:[%s2 + $0x94] sm:$0xf]
    %v113 = vld [vmem:[%s2 + $0x98] sm:$0xf]
    %v114 = vld [vmem:[%s2 + $0x9c] sm:$0xf]
    %v115 = vld [vmem:[%s2 + $0xa0] sm:$0xf]
    %v116 = vld [vmem:[%s2 + $0xa4] sm:$0xf]
    %v117 = vld [vmem:[%s2 + $0xa8] sm:$0xf]
    %v118 = vld [vmem:[%s2 + $0xac] sm:$0xf]
    %v119 = vld [vmem:[%s2 + $0xb0] sm:$0xf]
    %v120 = vld [vmem:[%s2 + $0xb4] sm:$0xf]
    %v121 = vld [vmem:[%s2 + $0xb8] sm:$0xf]
    %v122 = vld [vmem:[%s2 + $0xbc] sm:$0xf]
    %v127 = vunpack.c.l.b16 %v75
    %v128 = vunpack.c.l.b16 %v76
    %v129 = vunpack.c.l.b16 %v77
    %v130 = vunpack.c.l.b16 %v78
    %v131 = vpack.c.b16 %v128, %v127
    %v132 = vpack.c.b16 %v130, %v129
    %v136 = vsel %vm34, %v74, 0
    %138 = vmatprep.subr.bf16.mxu0 0
    %139 = vmatpush1.bf16.msra.mxu0 0
    %140 = vmatprep.subr.bf16.mxu0 0
    %141 = vmatpush1.bf16.msra.mxu0 0
    %142 = vmatprep.subr.bf16.mxu0 0
    %143 = vmatpush1.bf16.msra.mxu0 0
    %144 = vmatprep.subr.bf16.mxu0 0
    %145 = vmatpush1.bf16.msra.mxu0 0
    %146 = vmatprep.subr.bf16.mxu0 0
    %147 = vmatpush1.bf16.msra.mxu0 0
    %148 = vmatprep.subr.bf16.mxu0 0
    %149 = vmatpush1.bf16.msra.mxu0 0
    %150 = vmatprep.subr.bf16.mxu0 0
    %151 = vmatpush1.bf16.msra.mxu0 %v132
    %152 = vmatprep.subr.bf16.mxu0 0
    %153 = vmatpush1.bf16.msra.mxu0 %v131
    %154 = vmatprep.subr.bf16.mxu0 0
    %155 = vmatpush2.bf16.msra.mxu0 0
    %156 = vmatprep.subr.bf16.mxu0 0
    %157 = vmatpush2.bf16.msra.mxu0 0
    %158 = vmatprep.subr.bf16.mxu0 0
    %159 = vmatpush2.bf16.msra.mxu0 0
    %160 = vmatprep.subr.bf16.mxu0 0
    %161 = vmatpush2.bf16.msra.mxu0 0
    %162 = vmatprep.subr.bf16.mxu0 0
    %163 = vmatpush2.bf16.msra.mxu0 0
    %164 = vmatprep.subr.bf16.mxu0 0
    %165 = vmatpush2.bf16.msra.mxu0 0
    %166 = vmatprep.subr.bf16.mxu0 0
    %167 = vmatpush2.bf16.msra.mxu0 0
    %168 = vmatprep.subr.bf16.mxu0 0
    %169 = vmatpush2.bf16.msra.mxu0 0
    %170 = vmatprep.mubr.bf16.mxu0 0
    %171 = vmatmul.mubr.bf16.gmra.mxu0 %v136
    %v172 = vpop.f32.mrf.mxu0
    %v173 = vadd.f32 0.0, %v172
    %v174 = vpop.f32.mrf.mxu0
    %v175 = vpop.f32.mrf.mxu0
    %v176 = vadd.f32 0.0, %v175
    %v177 = vpop.f32.mrf.mxu0
    %178 = vdwg.mxu0
    %v183 = vunpack.c.l.b16 %v79
    %v184 = vunpack.c.l.b16 %v80
    %v185 = vunpack.c.l.b16 %v81
    %v186 = vunpack.c.l.b16 %v82
    %v187 = vpack.c.b16 %v184, %v183
    %v188 = vpack.c.b16 %v186, %v185
    %191 = vmatprep.subr.bf16.mxu0 0
    %192 = vmatpush1.bf16.msra.mxu0 0
    %193 = vmatprep.subr.bf16.mxu0 0
    %194 = vmatpush1.bf16.msra.mxu0 0
    %195 = vmatprep.subr.bf16.mxu0 0
    %196 = vmatpush1.bf16.msra.mxu0 0
    %197 = vmatprep.subr.bf16.mxu0 0
    %198 = vmatpush1.bf16.msra.mxu0 0
    %199 = vmatprep.subr.bf16.mxu0 0
    %200 = vmatpush1.bf16.msra.mxu0 0
    %201 = vmatprep.subr.bf16.mxu0 0
    %202 = vmatpush1.bf16.msra.mxu0 0
    %203 = vmatprep.subr.bf16.mxu0 0
    %204 = vmatpush1.bf16.msra.mxu0 %v188
    %205 = vmatprep.subr.bf16.mxu0 0
    %206 = vmatpush1.bf16.msra.mxu0 %v187
    %207 = vmatprep.subr.bf16.mxu0 0
    %208 = vmatpush2.bf16.msra.mxu0 0
    %209 = vmatprep.subr.bf16.mxu0 0
    %210 = vmatpush2.bf16.msra.mxu0 0
    %211 = vmatprep.subr.bf16.mxu0 0
    %212 = vmatpush2.bf16.msra.mxu0 0
    %213 = vmatprep.subr.bf16.mxu0 0
    %214 = vmatpush2.bf16.msra.mxu0 0
    %215 = vmatprep.subr.bf16.mxu0 0
    %216 = vmatpush2.bf16.msra.mxu0 0
    %217 = vmatprep.subr.bf16.mxu0 0
    %218 = vmatpush2.bf16.msra.mxu0 0
    %219 = vmatprep.subr.bf16.mxu0 0
    %220 = vmatpush2.bf16.msra.mxu0 0
    %221 = vmatprep.subr.bf16.mxu0 0
    %222 = vmatpush2.bf16.msra.mxu0 0
    %223 = vmatprep.mubr.bf16.mxu0 0
    %224 = vmatmul.mubr.bf16.gmra.mxu0 %v136
    %v225 = vpop.f32.mrf.mxu0
    %v226 = vadd.f32 0.0, %v225
    %v227 = vpop.f32.mrf.mxu0
    %v228 = vpop.f32.mrf.mxu0
    %v229 = vadd.f32 0.0, %v228
    %v230 = vpop.f32.mrf.mxu0
    %231 = vdwg.mxu0
    %v236 = vunpack.c.l.b16 %v83
    %v237 = vunpack.c.l.b16 %v84
    %v238 = vunpack.c.l.b16 %v85
    %v239 = vunpack.c.l.b16 %v86
    %v240 = vpack.c.b16 %v237, %v236
    %v241 = vpack.c.b16 %v239, %v238
    %244 = vmatprep.subr.bf16.mxu0 0
    %245 = vmatpush1.bf16.msra.mxu0 0
    %246 = vmatprep.subr.bf16.mxu0 0
    %247 = vmatpush1.bf16.msra.mxu0 0
    %248 = vmatprep.subr.bf16.mxu0 0
    %249 = vmatpush1.bf16.msra.mxu0 0
    %250 = vmatprep.subr.bf16.mxu0 0
    %251 = vmatpush1.bf16.msra.mxu0 0
    %252 = vmatprep.subr.bf16.mxu0 0
    %253 = vmatpush1.bf16.msra.mxu0 0
    %254 = vmatprep.subr.bf16.mxu0 0
    %255 = vmatpush1.bf16.msra.mxu0 0
    %256 = vmatprep.subr.bf16.mxu0 0
    %257 = vmatpush1.bf16.msra.mxu0 %v241
    %258 = vmatprep.subr.bf16.mxu0 0
    %259 = vmatpush1.bf16.msra.mxu0 %v240
    %260 = vmatprep.subr.bf16.mxu0 0
    %261 = vmatpush2.bf16.msra.mxu0 0
    %262 = vmatprep.subr.bf16.mxu0 0
    %263 = vmatpush2.bf16.msra.mxu0 0
    %264 = vmatprep.subr.bf16.mxu0 0
    %265 = vmatpush2.bf16.msra.mxu0 0
    %266 = vmatprep.subr.bf16.mxu0 0
    %267 = vmatpush2.bf16.msra.mxu0 0
    %268 = vmatprep.subr.bf16.mxu0 0
    %269 = vmatpush2.bf16.msra.mxu0 0
    %270 = vmatprep.subr.bf16.mxu0 0
    %271 = vmatpush2.bf16.msra.mxu0 0
    %272 = vmatprep.subr.bf16.mxu0 0
    %273 = vmatpush2.bf16.msra.mxu0 0
    %274 = vmatprep.subr.bf16.mxu0 0
    %275 = vmatpush2.bf16.msra.mxu0 0
    %276 = vmatprep.mubr.bf16.mxu0 0
    %277 = vmatmul.mubr.bf16.gmra.mxu0 %v136
    %v278 = vpop.f32.mrf.mxu0
    %v279 = vadd.f32 0.0, %v278
    %v280 = vpop.f32.mrf.mxu0
    %v281 = vpop.f32.mrf.mxu0
    %v282 = vadd.f32 0.0, %v281
    %v283 = vpop.f32.mrf.mxu0
    %284 = vdwg.mxu0
    %v289 = vunpack.c.l.b16 %v87
    %v290 = vunpack.c.l.b16 %v88
    %v291 = vunpack.c.l.b16 %v89
    %v292 = vunpack.c.l.b16 %v90
    %v293 = vpack.c.b16 %v290, %v289
    %v294 = vpack.c.b16 %v292, %v291
    %297 = vmatprep.subr.bf16.mxu0 0
    %298 = vmatpush1.bf16.msra.mxu0 0
    %299 = vmatprep.subr.bf16.mxu0 0
    %300 = vmatpush1.bf16.msra.mxu0 0
    %301 = vmatprep.subr.bf16.mxu0 0
    %302 = vmatpush1.bf16.msra.mxu0 0
    %303 = vmatprep.subr.bf16.mxu0 0
    %304 = vmatpush1.bf16.msra.mxu0 0
    %305 = vmatprep.subr.bf16.mxu0 0
    %306 = vmatpush1.bf16.msra.mxu0 0
    %307 = vmatprep.subr.bf16.mxu0 0
    %308 = vmatpush1.bf16.msra.mxu0 0
    %309 = vmatprep.subr.bf16.mxu0 0
    %310 = vmatpush1.bf16.msra.mxu0 %v294
    %311 = vmatprep.subr.bf16.mxu0 0
    %312 = vmatpush1.bf16.msra.mxu0 %v293
    %313 = vmatprep.subr.bf16.mxu0 0
    %314 = vmatpush2.bf16.msra.mxu0 0
    %315 = vmatprep.subr.bf16.mxu0 0
    %316 = vmatpush2.bf16.msra.mxu0 0
    %317 = vmatprep.subr.bf16.mxu0 0
    %318 = vmatpush2.bf16.msra.mxu0 0
    %319 = vmatprep.subr.bf16.mxu0 0
    %320 = vmatpush2.bf16.msra.mxu0 0
    %321 = vmatprep.subr.bf16.mxu0 0
    %322 = vmatpush2.bf16.msra.mxu0 0
    %323 = vmatprep.subr.bf16.mxu0 0
    %324 = vmatpush2.bf16.msra.mxu0 0
    %325 = vmatprep.subr.bf16.mxu0 0
    %326 = vmatpush2.bf16.msra.mxu0 0
    %327 = vmatprep.subr.bf16.mxu0 0
    %328 = vmatpush2.bf16.msra.mxu0 0
    %329 = vmatprep.mubr.bf16.mxu0 0
    %330 = vmatmul.mubr.bf16.gmra.mxu0 %v136
    %v331 = vpop.f32.mrf.mxu0
    %v332 = vadd.f32 0.0, %v331
    %v333 = vpop.f32.mrf.mxu0
    %v334 = vpop.f32.mrf.mxu0
    %v335 = vadd.f32 0.0, %v334
    %v336 = vpop.f32.mrf.mxu0
    %337 = vdwg.mxu0
    %v342 = vunpack.c.l.b16 %v91
    %v343 = vunpack.c.l.b16 %v92
    %v344 = vunpack.c.l.b16 %v93
    %v345 = vunpack.c.l.b16 %v94
    %v346 = vpack.c.b16 %v343, %v342
    %v347 = vpack.c.b16 %v345, %v344
    %350 = vmatprep.subr.bf16.mxu0 0
    %351 = vmatpush1.bf16.msra.mxu0 0
    %352 = vmatprep.subr.bf16.mxu0 0
    %353 = vmatpush1.bf16.msra.mxu0 0
    %354 = vmatprep.subr.bf16.mxu0 0
    %355 = vmatpush1.bf16.msra.mxu0 0
    %356 = vmatprep.subr.bf16.mxu0 0
    %357 = vmatpush1.bf16.msra.mxu0 0
    %358 = vmatprep.subr.bf16.mxu0 0
    %359 = vmatpush1.bf16.msra.mxu0 0
    %360 = vmatprep.subr.bf16.mxu0 0
    %361 = vmatpush1.bf16.msra.mxu0 0
    %362 = vmatprep.subr.bf16.mxu0 0
    %363 = vmatpush1.bf16.msra.mxu0 %v347
    %364 = vmatprep.subr.bf16.mxu0 0
    %365 = vmatpush1.bf16.msra.mxu0 %v346
    %366 = vmatprep.subr.bf16.mxu0 0
    %367 = vmatpush2.bf16.msra.mxu0 0
    %368 = vmatprep.subr.bf16.mxu0 0
    %369 = vmatpush2.bf16.msra.mxu0 0
    %370 = vmatprep.subr.bf16.mxu0 0
    %371 = vmatpush2.bf16.msra.mxu0 0
    %372 = vmatprep.subr.bf16.mxu0 0
    %373 = vmatpush2.bf16.msra.mxu0 0
    %374 = vmatprep.subr.bf16.mxu0 0
    %375 = vmatpush2.bf16.msra.mxu0 0
    %376 = vmatprep.subr.bf16.mxu0 0
    %377 = vmatpush2.bf16.msra.mxu0 0
    %378 = vmatprep.subr.bf16.mxu0 0
    %379 = vmatpush2.bf16.msra.mxu0 0
    %380 = vmatprep.subr.bf16.mxu0 0
    %381 = vmatpush2.bf16.msra.mxu0 0
    %382 = vmatprep.mubr.bf16.mxu0 0
    %383 = vmatmul.mubr.bf16.gmra.mxu0 %v136
    %v384 = vpop.f32.mrf.mxu0
    %v385 = vadd.f32 0.0, %v384
    %v386 = vpop.f32.mrf.mxu0
    %v387 = vpop.f32.mrf.mxu0
    %v388 = vadd.f32 0.0, %v387
    %v389 = vpop.f32.mrf.mxu0
    %390 = vdwg.mxu0
    %v395 = vunpack.c.l.b16 %v95
    %v396 = vunpack.c.l.b16 %v96
    %v397 = vunpack.c.l.b16 %v97
    %v398 = vunpack.c.l.b16 %v98
    %v399 = vpack.c.b16 %v396, %v395
    %v400 = vpack.c.b16 %v398, %v397
    %403 = vmatprep.subr.bf16.mxu0 0
    %404 = vmatpush1.bf16.msra.mxu0 0
    %405 = vmatprep.subr.bf16.mxu0 0
    %406 = vmatpush1.bf16.msra.mxu0 0
    %407 = vmatprep.subr.bf16.mxu0 0
    %408 = vmatpush1.bf16.msra.mxu0 0
    %409 = vmatprep.subr.bf16.mxu0 0
    %410 = vmatpush1.bf16.msra.mxu0 0
    %411 = vmatprep.subr.bf16.mxu0 0
    %412 = vmatpush1.bf16.msra.mxu0 0
    %413 = vmatprep.subr.bf16.mxu0 0
    %414 = vmatpush1.bf16.msra.mxu0 0
    %415 = vmatprep.subr.bf16.mxu0 0
    %416 = vmatpush1.bf16.msra.mxu0 %v400
    %417 = vmatprep.subr.bf16.mxu0 0
    %418 = vmatpush1.bf16.msra.mxu0 %v399
    %419 = vmatprep.subr.bf16.mxu0 0
    %420 = vmatpush2.bf16.msra.mxu0 0
    %421 = vmatprep.subr.bf16.mxu0 0
    %422 = vmatpush2.bf16.msra.mxu0 0
    %423 = vmatprep.subr.bf16.mxu0 0
    %424 = vmatpush2.bf16.msra.mxu0 0
    %425 = vmatprep.subr.bf16.mxu0 0
    %426 = vmatpush2.bf16.msra.mxu0 0
    %427 = vmatprep.subr.bf16.mxu0 0
    %428 = vmatpush2.bf16.msra.mxu0 0
    %429 = vmatprep.subr.bf16.mxu0 0
    %430 = vmatpush2.bf16.msra.mxu0 0
    %431 = vmatprep.subr.bf16.mxu0 0
    %432 = vmatpush2.bf16.msra.mxu0 0
    %433 = vmatprep.subr.bf16.mxu0 0
    %434 = vmatpush2.bf16.msra.mxu0 0
    %435 = vmatprep.mubr.bf16.mxu0 0
    %436 = vmatmul.mubr.bf16.gmra.mxu0 %v136
    %v437 = vpop.f32.mrf.mxu0
    %v438 = vadd.f32 0.0, %v437
    %v439 = vpop.f32.mrf.mxu0
    %v440 = vpop.f32.mrf.mxu0
    %v441 = vadd.f32 0.0, %v440
    %v442 = vpop.f32.mrf.mxu0
    %443 = vdwg.mxu0
    %v448 = vunpack.c.l.b16 %v99
    %v449 = vunpack.c.l.b16 %v100
    %v450 = vunpack.c.l.b16 %v101
    %v451 = vunpack.c.l.b16 %v102
    %v452 = vpack.c.b16 %v449, %v448
    %v453 = vpack.c.b16 %v451, %v450
    %456 = vmatprep.subr.bf16.mxu0 0
    %457 = vmatpush1.bf16.msra.mxu0 0
    %458 = vmatprep.subr.bf16.mxu0 0
    %459 = vmatpush1.bf16.msra.mxu0 0
    %460 = vmatprep.subr.bf16.mxu0 0
    %461 = vmatpush1.bf16.msra.mxu0 0
    %462 = vmatprep.subr.bf16.mxu0 0
    %463 = vmatpush1.bf16.msra.mxu0 0
    %464 = vmatprep.subr.bf16.mxu0 0
    %465 = vmatpush1.bf16.msra.mxu0 0
    %466 = vmatprep.subr.bf16.mxu0 0
    %467 = vmatpush1.bf16.msra.mxu0 0
    %468 = vmatprep.subr.bf16.mxu0 0
    %469 = vmatpush1.bf16.msra.mxu0 %v453
    %470 = vmatprep.subr.bf16.mxu0 0
    %471 = vmatpush1.bf16.msra.mxu0 %v452
    %472 = vmatprep.subr.bf16.mxu0 0
    %473 = vmatpush2.bf16.msra.mxu0 0
    %474 = vmatprep.subr.bf16.mxu0 0
    %475 = vmatpush2.bf16.msra.mxu0 0
    %476 = vmatprep.subr.bf16.mxu0 0
    %477 = vmatpush2.bf16.msra.mxu0 0
    %478 = vmatprep.subr.bf16.mxu0 0
    %479 = vmatpush2.bf16.msra.mxu0 0
    %480 = vmatprep.subr.bf16.mxu0 0
    %481 = vmatpush2.bf16.msra.mxu0 0
    %482 = vmatprep.subr.bf16.mxu0 0
    %483 = vmatpush2.bf16.msra.mxu0 0
    %484 = vmatprep.subr.bf16.mxu0 0
    %485 = vmatpush2.bf16.msra.mxu0 0
    %486 = vmatprep.subr.bf16.mxu0 0
    %487 = vmatpush2.bf16.msra.mxu0 0
    %488 = vmatprep.mubr.bf16.mxu0 0
    %489 = vmatmul.mubr.bf16.gmra.mxu0 %v136
    %v490 = vpop.f32.mrf.mxu0
    %v491 = vadd.f32 0.0, %v490
    %v492 = vpop.f32.mrf.mxu0
    %v493 = vpop.f32.mrf.mxu0
    %v494 = vadd.f32 0.0, %v493
    %v495 = vpop.f32.mrf.mxu0
    %496 = vdwg.mxu0
    %v501 = vunpack.c.l.b16 %v103
    %v502 = vunpack.c.l.b16 %v104
    %v503 = vunpack.c.l.b16 %v105
    %v504 = vunpack.c.l.b16 %v106
    %v505 = vpack.c.b16 %v502, %v501
    %v506 = vpack.c.b16 %v504, %v503
    %509 = vmatprep.subr.bf16.mxu0 0
    %510 = vmatpush1.bf16.msra.mxu0 0
    %511 = vmatprep.subr.bf16.mxu0 0
    %512 = vmatpush1.bf16.msra.mxu0 0
    %513 = vmatprep.subr.bf16.mxu0 0
    %514 = vmatpush1.bf16.msra.mxu0 0
    %515 = vmatprep.subr.bf16.mxu0 0
    %516 = vmatpush1.bf16.msra.mxu0 0
    %517 = vmatprep.subr.bf16.mxu0 0
    %518 = vmatpush1.bf16.msra.mxu0 0
    %519 = vmatprep.subr.bf16.mxu0 0
    %520 = vmatpush1.bf16.msra.mxu0 0
    %521 = vmatprep.subr.bf16.mxu0 0
    %522 = vmatpush1.bf16.msra.mxu0 %v506
    %523 = vmatprep.subr.bf16.mxu0 0
    %524 = vmatpush1.bf16.msra.mxu0 %v505
    %525 = vmatprep.subr.bf16.mxu0 0
    %526 = vmatpush2.bf16.msra.mxu0 0
    %527 = vmatprep.subr.bf16.mxu0 0
    %528 = vmatpush2.bf16.msra.mxu0 0
    %529 = vmatprep.subr.bf16.mxu0 0
    %530 = vmatpush2.bf16.msra.mxu0 0
    %531 = vmatprep.subr.bf16.mxu0 0
    %532 = vmatpush2.bf16.msra.mxu0 0
    %533 = vmatprep.subr.bf16.mxu0 0
    %534 = vmatpush2.bf16.msra.mxu0 0
    %535 = vmatprep.subr.bf16.mxu0 0
    %536 = vmatpush2.bf16.msra.mxu0 0
    %537 = vmatprep.subr.bf16.mxu0 0
    %538 = vmatpush2.bf16.msra.mxu0 0
    %539 = vmatprep.subr.bf16.mxu0 0
    %540 = vmatpush2.bf16.msra.mxu0 0
    %541 = vmatprep.mubr.bf16.mxu0 0
    %542 = vmatmul.mubr.bf16.gmra.mxu0 %v136
    %v543 = vpop.f32.mrf.mxu0
    %v544 = vadd.f32 0.0, %v543
    %v545 = vpop.f32.mrf.mxu0
    %v546 = vpop.f32.mrf.mxu0
    %v547 = vadd.f32 0.0, %v546
    %v548 = vpop.f32.mrf.mxu0
    %549 = vdwg.mxu0
    %v554 = vunpack.c.l.b16 %v107
    %v555 = vunpack.c.l.b16 %v108
    %v556 = vunpack.c.l.b16 %v109
    %v557 = vunpack.c.l.b16 %v110
    %v558 = vpack.c.b16 %v555, %v554
    %v559 = vpack.c.b16 %v557, %v556
    %562 = vmatprep.subr.bf16.mxu0 0
    %563 = vmatpush1.bf16.msra.mxu0 0
    %564 = vmatprep.subr.bf16.mxu0 0
    %565 = vmatpush1.bf16.msra.mxu0 0
    %566 = vmatprep.subr.bf16.mxu0 0
    %567 = vmatpush1.bf16.msra.mxu0 0
    %568 = vmatprep.subr.bf16.mxu0 0
    %569 = vmatpush1.bf16.msra.mxu0 0
    %570 = vmatprep.subr.bf16.mxu0 0
    %571 = vmatpush1.bf16.msra.mxu0 0
    %572 = vmatprep.subr.bf16.mxu0 0
    %573 = vmatpush1.bf16.msra.mxu0 0
    %574 = vmatprep.subr.bf16.mxu0 0
    %575 = vmatpush1.bf16.msra.mxu0 %v559
    %576 = vmatprep.subr.bf16.mxu0 0
    %577 = vmatpush1.bf16.msra.mxu0 %v558
    %578 = vmatprep.subr.bf16.mxu0 0
    %579 = vmatpush2.bf16.msra.mxu0 0
    %580 = vmatprep.subr.bf16.mxu0 0
    %581 = vmatpush2.bf16.msra.mxu0 0
    %582 = vmatprep.subr.bf16.mxu0 0
    %583 = vmatpush2.bf16.msra.mxu0 0
    %584 = vmatprep.subr.bf16.mxu0 0
    %585 = vmatpush2.bf16.msra.mxu0 0
    %586 = vmatprep.subr.bf16.mxu0 0
    %587 = vmatpush2.bf16.msra.mxu0 0
    %588 = vmatprep.subr.bf16.mxu0 0
    %589 = vmatpush2.bf16.msra.mxu0 0
    %590 = vmatprep.subr.bf16.mxu0 0
    %591 = vmatpush2.bf16.msra.mxu0 0
    %592 = vmatprep.subr.bf16.mxu0 0
    %593 = vmatpush2.bf16.msra.mxu0 0
    %594 = vmatprep.mubr.bf16.mxu0 0
    %595 = vmatmul.mubr.bf16.gmra.mxu0 %v136
    %v596 = vpop.f32.mrf.mxu0
    %v597 = vadd.f32 0.0, %v596
    %v598 = vpop.f32.mrf.mxu0
    %v599 = vpop.f32.mrf.mxu0
    %v600 = vadd.f32 0.0, %v599
    %v601 = vpop.f32.mrf.mxu0
    %602 = vdwg.mxu0
    %v607 = vunpack.c.l.b16 %v111
    %v608 = vunpack.c.l.b16 %v112
    %v609 = vunpack.c.l.b16 %v113
    %v610 = vunpack.c.l.b16 %v114
    %v611 = vpack.c.b16 %v608, %v607
    %v612 = vpack.c.b16 %v610, %v609
    %615 = vmatprep.subr.bf16.mxu0 0
    %616 = vmatpush1.bf16.msra.mxu0 0
    %617 = vmatprep.subr.bf16.mxu0 0
    %618 = vmatpush1.bf16.msra.mxu0 0
    %619 = vmatprep.subr.bf16.mxu0 0
    %620 = vmatpush1.bf16.msra.mxu0 0
    %621 = vmatprep.subr.bf16.mxu0 0
    %622 = vmatpush1.bf16.msra.mxu0 0
    %623 = vmatprep.subr.bf16.mxu0 0
    %624 = vmatpush1.bf16.msra.mxu0 0
    %625 = vmatprep.subr.bf16.mxu0 0
    %626 = vmatpush1.bf16.msra.mxu0 0
    %627 = vmatprep.subr.bf16.mxu0 0
    %628 = vmatpush1.bf16.msra.mxu0 %v612
    %629 = vmatprep.subr.bf16.mxu0 0
    %630 = vmatpush1.bf16.msra.mxu0 %v611
    %631 = vmatprep.subr.bf16.mxu0 0
    %632 = vmatpush2.bf16.msra.mxu0 0
    %633 = vmatprep.subr.bf16.mxu0 0
    %634 = vmatpush2.bf16.msra.mxu0 0
    %635 = vmatprep.subr.bf16.mxu0 0
    %636 = vmatpush2.bf16.msra.mxu0 0
    %637 = vmatprep.subr.bf16.mxu0 0
    %638 = vmatpush2.bf16.msra.mxu0 0
    %639 = vmatprep.subr.bf16.mxu0 0
    %640 = vmatpush2.bf16.msra.mxu0 0
    %641 = vmatprep.subr.bf16.mxu0 0
    %642 = vmatpush2.bf16.msra.mxu0 0
    %643 = vmatprep.subr.bf16.mxu0 0
    %644 = vmatpush2.bf16.msra.mxu0 0
    %645 = vmatprep.subr.bf16.mxu0 0
    %646 = vmatpush2.bf16.msra.mxu0 0
    %647 = vmatprep.mubr.bf16.mxu0 0
    %648 = vmatmul.mubr.bf16.gmra.mxu0 %v136
    %v649 = vpop.f32.mrf.mxu0
    %v650 = vadd.f32 0.0, %v649
    %v651 = vpop.f32.mrf.mxu0
    %v652 = vpop.f32.mrf.mxu0
    %v653 = vadd.f32 0.0, %v652
    %v654 = vpop.f32.mrf.mxu0
    %655 = vdwg.mxu0
    %v660 = vunpack.c.l.b16 %v115
    %v661 = vunpack.c.l.b16 %v116
    %v662 = vunpack.c.l.b16 %v117
    %v663 = vunpack.c.l.b16 %v118
    %v664 = vpack.c.b16 %v661, %v660
    %v665 = vpack.c.b16 %v663, %v662
    %668 = vmatprep.subr.bf16.mxu0 0
    %669 = vmatpush1.bf16.msra.mxu0 0
    %670 = vmatprep.subr.bf16.mxu0 0
    %671 = vmatpush1.bf16.msra.mxu0 0
    %672 = vmatprep.subr.bf16.mxu0 0
    %673 = vmatpush1.bf16.msra.mxu0 0
    %674 = vmatprep.subr.bf16.mxu0 0
    %675 = vmatpush1.bf16.msra.mxu0 0
    %676 = vmatprep.subr.bf16.mxu0 0
    %677 = vmatpush1.bf16.msra.mxu0 0
    %678 = vmatprep.subr.bf16.mxu0 0
    %679 = vmatpush1.bf16.msra.mxu0 0
    %680 = vmatprep.subr.bf16.mxu0 0
    %681 = vmatpush1.bf16.msra.mxu0 %v665
    %682 = vmatprep.subr.bf16.mxu0 0
    %683 = vmatpush1.bf16.msra.mxu0 %v664
    %684 = vmatprep.subr.bf16.mxu0 0
    %685 = vmatpush2.bf16.msra.mxu0 0
    %686 = vmatprep.subr.bf16.mxu0 0
    %687 = vmatpush2.bf16.msra.mxu0 0
    %688 = vmatprep.subr.bf16.mxu0 0
    %689 = vmatpush2.bf16.msra.mxu0 0
    %690 = vmatprep.subr.bf16.mxu0 0
    %691 = vmatpush2.bf16.msra.mxu0 0
    %692 = vmatprep.subr.bf16.mxu0 0
    %693 = vmatpush2.bf16.msra.mxu0 0
    %694 = vmatprep.subr.bf16.mxu0 0
    %695 = vmatpush2.bf16.msra.mxu0 0
    %696 = vmatprep.subr.bf16.mxu0 0
    %697 = vmatpush2.bf16.msra.mxu0 0
    %698 = vmatprep.subr.bf16.mxu0 0
    %699 = vmatpush2.bf16.msra.mxu0 0
    %700 = vmatprep.mubr.bf16.mxu0 0
    %701 = vmatmul.mubr.bf16.gmra.mxu0 %v136
    %v702 = vpop.f32.mrf.mxu0
    %v703 = vadd.f32 0.0, %v702
    %v704 = vpop.f32.mrf.mxu0
    %v705 = vpop.f32.mrf.mxu0
    %v706 = vadd.f32 0.0, %v705
    %v707 = vpop.f32.mrf.mxu0
    %708 = vdwg.mxu0
    %v713 = vunpack.c.l.b16 %v119
    %v714 = vunpack.c.l.b16 %v120
    %v715 = vunpack.c.l.b16 %v121
    %v716 = vunpack.c.l.b16 %v122
    %v717 = vpack.c.b16 %v714, %v713
    %v718 = vpack.c.b16 %v716, %v715
    %721 = vmatprep.subr.bf16.mxu0 0
    %722 = vmatpush1.bf16.msra.mxu0 0
    %723 = vmatprep.subr.bf16.mxu0 0
    %724 = vmatpush1.bf16.msra.mxu0 0
    %725 = vmatprep.subr.bf16.mxu0 0
    %726 = vmatpush1.bf16.msra.mxu0 0
    %727 = vmatprep.subr.bf16.mxu0 0
    %728 = vmatpush1.bf16.msra.mxu0 0
    %729 = vmatprep.subr.bf16.mxu0 0
    %730 = vmatpush1.bf16.msra.mxu0 0
    %731 = vmatprep.subr.bf16.mxu0 0
    %732 = vmatpush1.bf16.msra.mxu0 0
    %733 = vmatprep.subr.bf16.mxu0 0
    %734 = vmatpush1.bf16.msra.mxu0 %v718
    %735 = vmatprep.subr.bf16.mxu0 0
    %736 = vmatpush1.bf16.msra.mxu0 %v717
    %737 = vmatprep.subr.bf16.mxu0 0
    %738 = vmatpush2.bf16.msra.mxu0 0
    %739 = vmatprep.subr.bf16.mxu0 0
    %740 = vmatpush2.bf16.msra.mxu0 0
    %741 = vmatprep.subr.bf16.mxu0 0
    %742 = vmatpush2.bf16.msra.mxu0 0
    %743 = vmatprep.subr.bf16.mxu0 0
    %744 = vmatpush2.bf16.msra.mxu0 0
    %745 = vmatprep.subr.bf16.mxu0 0
    %746 = vmatpush2.bf16.msra.mxu0 0
    %747 = vmatprep.subr.bf16.mxu0 0
    %748 = vmatpush2.bf16.msra.mxu0 0
    %749 = vmatprep.subr.bf16.mxu0 0
    %750 = vmatpush2.bf16.msra.mxu0 0
    %751 = vmatprep.subr.bf16.mxu0 0
    %752 = vmatpush2.bf16.msra.mxu0 0
    %753 = vmatprep.mubr.bf16.mxu0 0
    %754 = vmatmul.mubr.bf16.gmra.mxu0 %v136
    %v755 = vpop.f32.mrf.mxu0
    %v756 = vadd.f32 0.0, %v755
    %v757 = vpop.f32.mrf.mxu0
    %v758 = vpop.f32.mrf.mxu0
    %v759 = vadd.f32 0.0, %v758
    %v760 = vpop.f32.mrf.mxu0
    %761 = vdwg.mxu0
    %v762 = vpack.c.bf16 %v176, %v173
    %v763 = vpack.c.bf16 %v229, %v226
    %v764 = vpack.c.bf16 %v282, %v279
    %v765 = vpack.c.bf16 %v335, %v332
    %v766 = vpack.c.bf16 %v388, %v385
    %v767 = vpack.c.bf16 %v441, %v438
    %v768 = vpack.c.bf16 %v494, %v491
    %v769 = vpack.c.bf16 %v547, %v544
    %v770 = vpack.c.bf16 %v600, %v597
    %v771 = vpack.c.bf16 %v653, %v650
    %v772 = vpack.c.bf16 %v706, %v703
    %v773 = vpack.c.bf16 %v759, %v756
    %v774 = vld [vmem:[%s1] sm:$0xff]
    %v775 = vld [vmem:[%s1 + $0x8] sm:$0xff]
    %vm776 = vcmask 64512
    %v778 = vsel %vm776, %v762, 0
    %v781 = vsel %vm776, %v766, 0
    %783 = vmatprep.subr.bf16.mxu0 0
    %784 = vmatpush1.bf16.xpose.msra.mxu0 0
    %785 = vmatprep.subr.bf16.mxu0 0
    %786 = vmatpush1.bf16.xpose.msra.mxu0 0
    %787 = vmatprep.subr.bf16.mxu0 0
    %788 = vmatpush1.bf16.xpose.msra.mxu0 0
    %789 = vmatprep.subr.bf16.mxu0 0
    %790 = vmatpush1.bf16.xpose.msra.mxu0 0
    %791 = vmatprep.subr.bf16.mxu0 0
    %792 = vmatpush1.bf16.xpose.msra.mxu0 0
    %793 = vmatprep.subr.bf16.mxu0 0
    %794 = vmatpush1.bf16.xpose.msra.mxu0 0
    %795 = vmatprep.subr.bf16.mxu0 0
    %796 = vmatpush1.bf16.xpose.msra.mxu0 0
    %797 = vmatprep.subr.bf16.mxu0 0
    %798 = vmatpush1.bf16.xpose.msra.mxu0 %v781
    %799 = vmatprep.subr.bf16.mxu0 0
    %800 = vmatpush2.bf16.xpose.msra.mxu0 0
    %801 = vmatprep.subr.bf16.mxu0 0
    %802 = vmatpush2.bf16.xpose.msra.mxu0 0
    %803 = vmatprep.subr.bf16.mxu0 0
    %804 = vmatpush2.bf16.xpose.msra.mxu0 0
    %805 = vmatprep.subr.bf16.mxu0 0
    %806 = vmatpush2.bf16.xpose.msra.mxu0 0
    %807 = vmatprep.subr.bf16.mxu0 0
    %808 = vmatpush2.bf16.xpose.msra.mxu0 0
    %809 = vmatprep.subr.bf16.mxu0 0
    %810 = vmatpush2.bf16.xpose.msra.mxu0 0
    %811 = vmatprep.subr.bf16.mxu0 0
    %812 = vmatpush2.bf16.xpose.msra.mxu0 0
    %813 = vmatprep.subr.bf16.mxu0 0
    %814 = vmatpush2.bf16.xpose.msra.mxu0 0
    %815 = vmatprep.mubr.bf16.mxu0 0
    %816 = vmatmul.mubr.bf16.gmra.mxu0 %v778
    %v817 = vpop.f32.mrf.mxu0
    %v818 = vadd.f32 %v774, %v817
    %v819 = vpop.f32.mrf.mxu0
    %v820 = vpop.f32.mrf.mxu0
    %v821 = vadd.f32 %v775, %v820
    %v822 = vpop.f32.mrf.mxu0
    %823 = vdwg.mxu0
    %v825 = vsel %vm776, %v763, 0
    %v828 = vsel %vm776, %v767, 0
    %830 = vmatprep.subr.bf16.mxu0 0
    %831 = vmatpush1.bf16.xpose.msra.mxu0 0
    %832 = vmatprep.subr.bf16.mxu0 0
    %833 = vmatpush1.bf16.xpose.msra.mxu0 0
    %834 = vmatprep.subr.bf16.mxu0 0
    %835 = vmatpush1.bf16.xpose.msra.mxu0 0
    %836 = vmatprep.subr.bf16.mxu0 0
    %837 = vmatpush1.bf16.xpose.msra.mxu0 0
    %838 = vmatprep.subr.bf16.mxu0 0
    %839 = vmatpush1.bf16.xpose.msra.mxu0 0
    %840 = vmatprep.subr.bf16.mxu0 0
    %841 = vmatpush1.bf16.xpose.msra.mxu0 0
    %842 = vmatprep.subr.bf16.mxu0 0
    %843 = vmatpush1.bf16.xpose.msra.mxu0 0
    %844 = vmatprep.subr.bf16.mxu0 0
    %845 = vmatpush1.bf16.xpose.msra.mxu0 %v828
    %846 = vmatprep.subr.bf16.mxu0 0
    %847 = vmatpush2.bf16.xpose.msra.mxu0 0
    %848 = vmatprep.subr.bf16.mxu0 0
    %849 = vmatpush2.bf16.xpose.msra.mxu0 0
    %850 = vmatprep.subr.bf16.mxu0 0
    %851 = vmatpush2.bf16.xpose.msra.mxu0 0
    %852 = vmatprep.subr.bf16.mxu0 0
    %853 = vmatpush2.bf16.xpose.msra.mxu0 0
    %854 = vmatprep.subr.bf16.mxu0 0
    %855 = vmatpush2.bf16.xpose.msra.mxu0 0
    %856 = vmatprep.subr.bf16.mxu0 0
    %857 = vmatpush2.bf16.xpose.msra.mxu0 0
    %858 = vmatprep.subr.bf16.mxu0 0
    %859 = vmatpush2.bf16.xpose.msra.mxu0 0
    %860 = vmatprep.subr.bf16.mxu0 0
    %861 = vmatpush2.bf16.xpose.msra.mxu0 0
    %862 = vmatprep.mubr.bf16.mxu0 0
    %863 = vmatmul.mubr.bf16.gmra.mxu0 %v825
    %v864 = vpop.f32.mrf.mxu0
    %v865 = vadd.f32 %v774, %v864
    %v866 = vpop.f32.mrf.mxu0
    %v867 = vpop.f32.mrf.mxu0
    %v868 = vadd.f32 %v775, %v867
    %v869 = vpop.f32.mrf.mxu0
    %870 = vdwg.mxu0
    %v872 = vsel %vm776, %v764, 0
    %v875 = vsel %vm776, %v768, 0
    %877 = vmatprep.subr.bf16.mxu0 0
    %878 = vmatpush1.bf16.xpose.msra.mxu0 0
    %879 = vmatprep.subr.bf16.mxu0 0
    %880 = vmatpush1.bf16.xpose.msra.mxu0 0
    %881 = vmatprep.subr.bf16.mxu0 0
    %882 = vmatpush1.bf16.xpose.msra.mxu0 0
    %883 = vmatprep.subr.bf16.mxu0 0
    %884 = vmatpush1.bf16.xpose.msra.mxu0 0
    %885 = vmatprep.subr.bf16.mxu0 0
    %886 = vmatpush1.bf16.xpose.msra.mxu0 0
    %887 = vmatprep.subr.bf16.mxu0 0
    %888 = vmatpush1.bf16.xpose.msra.mxu0 0
    %889 = vmatprep.subr.bf16.mxu0 0
    %890 = vmatpush1.bf16.xpose.msra.mxu0 0
    %891 = vmatprep.subr.bf16.mxu0 0
    %892 = vmatpush1.bf16.xpose.msra.mxu0 %v875
    %893 = vmatprep.subr.bf16.mxu0 0
    %894 = vmatpush2.bf16.xpose.msra.mxu0 0
    %895 = vmatprep.subr.bf16.mxu0 0
    %896 = vmatpush2.bf16.xpose.msra.mxu0 0
    %897 = vmatprep.subr.bf16.mxu0 0
    %898 = vmatpush2.bf16.xpose.msra.mxu0 0
    %899 = vmatprep.subr.bf16.mxu0 0
    %900 = vmatpush2.bf16.xpose.msra.mxu0 0
    %901 = vmatprep.subr.bf16.mxu0 0
    %902 = vmatpush2.bf16.xpose.msra.mxu0 0
    %903 = vmatprep.subr.bf16.mxu0 0
    %904 = vmatpush2.bf16.xpose.msra.mxu0 0
    %905 = vmatprep.subr.bf16.mxu0 0
    %906 = vmatpush2.bf16.xpose.msra.mxu0 0
    %907 = vmatprep.subr.bf16.mxu0 0
    %908 = vmatpush2.bf16.xpose.msra.mxu0 0
    %909 = vmatprep.mubr.bf16.mxu0 0
    %910 = vmatmul.mubr.bf16.gmra.mxu0 %v872
    %v911 = vpop.f32.mrf.mxu0
    %v912 = vadd.f32 %v774, %v911
    %v913 = vpop.f32.mrf.mxu0
    %v914 = vpop.f32.mrf.mxu0
    %v915 = vadd.f32 %v775, %v914
    %v916 = vpop.f32.mrf.mxu0
    %917 = vdwg.mxu0
    %v919 = vsel %vm776, %v765, 0
    %v922 = vsel %vm776, %v769, 0
    %924 = vmatprep.subr.bf16.mxu0 0
    %925 = vmatpush1.bf16.xpose.msra.mxu0 0
    %926 = vmatprep.subr.bf16.mxu0 0
    %927 = vmatpush1.bf16.xpose.msra.mxu0 0
    %928 = vmatprep.subr.bf16.mxu0 0
    %929 = vmatpush1.bf16.xpose.msra.mxu0 0
    %930 = vmatprep.subr.bf16.mxu0 0
    %931 = vmatpush1.bf16.xpose.msra.mxu0 0
    %932 = vmatprep.subr.bf16.mxu0 0
    %933 = vmatpush1.bf16.xpose.msra.mxu0 0
    %934 = vmatprep.subr.bf16.mxu0 0
    %935 = vmatpush1.bf16.xpose.msra.mxu0 0
    %936 = vmatprep.subr.bf16.mxu0 0
    %937 = vmatpush1.bf16.xpose.msra.mxu0 0
    %938 = vmatprep.subr.bf16.mxu0 0
    %939 = vmatpush1.bf16.xpose.msra.mxu0 %v922
    %940 = vmatprep.subr.bf16.mxu0 0
    %941 = vmatpush2.bf16.xpose.msra.mxu0 0
    %942 = vmatprep.subr.bf16.mxu0 0
    %943 = vmatpush2.bf16.xpose.msra.mxu0 0
    %944 = vmatprep.subr.bf16.mxu0 0
    %945 = vmatpush2.bf16.xpose.msra.mxu0 0
    %946 = vmatprep.subr.bf16.mxu0 0
    %947 = vmatpush2.bf16.xpose.msra.mxu0 0
    %948 = vmatprep.subr.bf16.mxu0 0
    %949 = vmatpush2.bf16.xpose.msra.mxu0 0
    %950 = vmatprep.subr.bf16.mxu0 0
    %951 = vmatpush2.bf16.xpose.msra.mxu0 0
    %952 = vmatprep.subr.bf16.mxu0 0
    %953 = vmatpush2.bf16.xpose.msra.mxu0 0
    %954 = vmatprep.subr.bf16.mxu0 0
    %955 = vmatpush2.bf16.xpose.msra.mxu0 0
    %956 = vmatprep.mubr.bf16.mxu0 0
    %957 = vmatmul.mubr.bf16.gmra.mxu0 %v919
    %v958 = vpop.f32.mrf.mxu0
    %v959 = vadd.f32 %v774, %v958
    %v960 = vpop.f32.mrf.mxu0
    %v961 = vpop.f32.mrf.mxu0
    %v962 = vadd.f32 %v775, %v961
    %v963 = vpop.f32.mrf.mxu0
    %964 = vdwg.mxu0
    %vm965 = vcmask 130048
    %v966 = vsel %vm965, %v818, -inf
    %967 = vmax.xlane.f32.xlu0 %v966
    %v968 = vpop.xlane.xlu0 %967
    %v969 = vsel %vm965, %v821, -inf
    %970 = vmax.xlane.f32.xlu0 %v969
    %v971 = vpop.xlane.xlu0 %970
    %v972 = vsel %vm965, %v865, -inf
    %973 = vmax.xlane.f32.xlu0 %v972
    %v974 = vpop.xlane.xlu0 %973
    %v975 = vsel %vm965, %v868, -inf
    %976 = vmax.xlane.f32.xlu0 %v975
    %v977 = vpop.xlane.xlu0 %976
    %v978 = vsel %vm965, %v912, -inf
    %979 = vmax.xlane.f32.xlu0 %v978
    %v980 = vpop.xlane.xlu0 %979
    %v981 = vsel %vm965, %v915, -inf
    %982 = vmax.xlane.f32.xlu0 %v981
    %v983 = vpop.xlane.xlu0 %982
    %v984 = vsel %vm965, %v959, -inf
    %985 = vmax.xlane.f32.xlu0 %v984
    %v986 = vpop.xlane.xlu0 %985
    %v987 = vsel %vm965, %v962, -inf
    %988 = vmax.xlane.f32.xlu0 %v987
    %v989 = vpop.xlane.xlu0 %988
    %v990 = vsub.f32 %v818, %v968
    %v991 = vsub.f32 %v821, %v971
    %v992 = vsub.f32 %v865, %v974
    %v993 = vsub.f32 %v868, %v977
    %v994 = vsub.f32 %v912, %v980
    %v995 = vsub.f32 %v915, %v983
    %v996 = vsub.f32 %v959, %v986
    %v997 = vsub.f32 %v962, %v989
    %v998 = vmul.f32 %v990, 1.442695
    %v999 = vpow.pop %v998
    %v1000 = vmul.f32 %v991, 1.442695
    %v1001 = vpow.pop %v1000
    %v1002 = vmul.f32 %v992, 1.442695
    %v1003 = vpow.pop %v1002
    %v1004 = vmul.f32 %v993, 1.442695
    %v1005 = vpow.pop %v1004
    %v1006 = vmul.f32 %v994, 1.442695
    %v1007 = vpow.pop %v1006
    %v1008 = vmul.f32 %v995, 1.442695
    %v1009 = vpow.pop %v1008
    %v1010 = vmul.f32 %v996, 1.442695
    %v1011 = vpow.pop %v1010
    %v1012 = vmul.f32 %v997, 1.442695
    %v1013 = vpow.pop %v1012
    %v1014 = vsel %vm965, %v999, 0.0
    %1015 = vadd.xlane.f32.xlu0 %v1014
    %v1016 = vpop.xlane.xlu0 %1015
    %v1017 = vsel %vm965, %v1001, 0.0
    %1018 = vadd.xlane.f32.xlu0 %v1017
    %v1019 = vpop.xlane.xlu0 %1018
    %v1020 = vsel %vm965, %v1003, 0.0
    %1021 = vadd.xlane.f32.xlu0 %v1020
    %v1022 = vpop.xlane.xlu0 %1021
    %v1023 = vsel %vm965, %v1005, 0.0
    %1024 = vadd.xlane.f32.xlu0 %v1023
    %v1025 = vpop.xlane.xlu0 %1024
    %v1026 = vsel %vm965, %v1007, 0.0
    %1027 = vadd.xlane.f32.xlu0 %v1026
    %v1028 = vpop.xlane.xlu0 %1027
    %v1029 = vsel %vm965, %v1009, 0.0
    %1030 = vadd.xlane.f32.xlu0 %v1029
    %v1031 = vpop.xlane.xlu0 %1030
    %v1032 = vsel %vm965, %v1011, 0.0
    %1033 = vadd.xlane.f32.xlu0 %v1032
    %v1034 = vpop.xlane.xlu0 %1033
    %v1035 = vsel %vm965, %v1013, 0.0
    %1036 = vadd.xlane.f32.xlu0 %v1035
    %v1037 = vpop.xlane.xlu0 %1036
    %v1038 = vrcp.pop %v1016
    %v1039 = vrcp.pop %v1019
    %v1040 = vrcp.pop %v1022
    %v1041 = vrcp.pop %v1025
    %v1042 = vrcp.pop %v1028
    %v1043 = vrcp.pop %v1031
    %v1044 = vrcp.pop %v1034
    %v1045 = vrcp.pop %v1037
    %v1046 = vmul.f32 %v999, %v1038
    %v1047 = vmul.f32 %v1001, %v1039
    %v1048 = vmul.f32 %v1003, %v1040
    %v1049 = vmul.f32 %v1005, %v1041
    %v1050 = vmul.f32 %v1007, %v1042
    %v1051 = vmul.f32 %v1009, %v1043
    %v1052 = vmul.f32 %v1011, %v1044
    %v1053 = vmul.f32 %v1013, %v1045
    %v1054 = vpack.c.bf16 %v1047, %v1046
    %v1055 = vpack.c.bf16 %v1049, %v1048
    %v1056 = vpack.c.bf16 %v1051, %v1050
    %v1057 = vpack.c.bf16 %v1053, %v1052
    %v1059 = vsel %vm965, %v1054, 0
    %1061 = vmatprep.subr.bf16.mxu0 0
    %1062 = vmatpush1.bf16.msra.mxu0 0
    %1063 = vmatprep.subr.bf16.mxu0 0
    %1064 = vmatpush1.bf16.msra.mxu0 0
    %1065 = vmatprep.subr.bf16.mxu0 0
    %1066 = vmatpush1.bf16.msra.mxu0 0
    %1067 = vmatprep.subr.bf16.mxu0 0
    %1068 = vmatpush1.bf16.msra.mxu0 0
    %1069 = vmatprep.subr.bf16.mxu0 0
    %1070 = vmatpush1.bf16.msra.mxu0 0
    %1071 = vmatprep.subr.bf16.mxu0 0
    %1072 = vmatpush1.bf16.msra.mxu0 0
    %1073 = vmatprep.subr.bf16.mxu0 0
    %1074 = vmatpush1.bf16.msra.mxu0 0
    %1075 = vmatprep.subr.bf16.mxu0 0
    %1076 = vmatpush1.bf16.msra.mxu0 %v770
    %1077 = vmatprep.subr.bf16.mxu0 0
    %1078 = vmatpush2.bf16.msra.mxu0 0
    %1079 = vmatprep.subr.bf16.mxu0 0
    %1080 = vmatpush2.bf16.msra.mxu0 0
    %1081 = vmatprep.subr.bf16.mxu0 0
    %1082 = vmatpush2.bf16.msra.mxu0 0
    %1083 = vmatprep.subr.bf16.mxu0 0
    %1084 = vmatpush2.bf16.msra.mxu0 0
    %1085 = vmatprep.subr.bf16.mxu0 0
    %1086 = vmatpush2.bf16.msra.mxu0 0
    %1087 = vmatprep.subr.bf16.mxu0 0
    %1088 = vmatpush2.bf16.msra.mxu0 0
    %1089 = vmatprep.subr.bf16.mxu0 0
    %1090 = vmatpush2.bf16.msra.mxu0 0
    %1091 = vmatprep.subr.bf16.mxu0 0
    %1092 = vmatpush2.bf16.msra.mxu0 0
    %1093 = vmatprep.mubr.bf16.mxu0 0
    %1094 = vmatmul.mubr.bf16.gmra.mxu0 %v1059
    %v1095 = vpop.f32.mrf.mxu0
    %v1096 = vadd.f32 0.0, %v1095
    %v1097 = vpop.f32.mrf.mxu0
    %v1098 = vpop.f32.mrf.mxu0
    %v1099 = vadd.f32 0.0, %v1098
    %v1100 = vpop.f32.mrf.mxu0
    %1101 = vdwg.mxu0
    %v1103 = vsel %vm965, %v1055, 0
    %1105 = vmatprep.subr.bf16.mxu0 0
    %1106 = vmatpush1.bf16.msra.mxu0 0
    %1107 = vmatprep.subr.bf16.mxu0 0
    %1108 = vmatpush1.bf16.msra.mxu0 0
    %1109 = vmatprep.subr.bf16.mxu0 0
    %1110 = vmatpush1.bf16.msra.mxu0 0
    %1111 = vmatprep.subr.bf16.mxu0 0
    %1112 = vmatpush1.bf16.msra.mxu0 0
    %1113 = vmatprep.subr.bf16.mxu0 0
    %1114 = vmatpush1.bf16.msra.mxu0 0
    %1115 = vmatprep.subr.bf16.mxu0 0
    %1116 = vmatpush1.bf16.msra.mxu0 0
    %1117 = vmatprep.subr.bf16.mxu0 0
    %1118 = vmatpush1.bf16.msra.mxu0 0
    %1119 = vmatprep.subr.bf16.mxu0 0
    %1120 = vmatpush1.bf16.msra.mxu0 %v771
    %1121 = vmatprep.subr.bf16.mxu0 0
    %1122 = vmatpush2.bf16.msra.mxu0 0
    %1123 = vmatprep.subr.bf16.mxu0 0
    %1124 = vmatpush2.bf16.msra.mxu0 0
    %1125 = vmatprep.subr.bf16.mxu0 0
    %1126 = vmatpush2.bf16.msra.mxu0 0
    %1127 = vmatprep.subr.bf16.mxu0 0
    %1128 = vmatpush2.bf16.msra.mxu0 0
    %1129 = vmatprep.subr.bf16.mxu0 0
    %1130 = vmatpush2.bf16.msra.mxu0 0
    %1131 = vmatprep.subr.bf16.mxu0 0
    %1132 = vmatpush2.bf16.msra.mxu0 0
    %1133 = vmatprep.subr.bf16.mxu0 0
    %1134 = vmatpush2.bf16.msra.mxu0 0
    %1135 = vmatprep.subr.bf16.mxu0 0
    %1136 = vmatpush2.bf16.msra.mxu0 0
    %1137 = vmatprep.mubr.bf16.mxu0 0
    %1138 = vmatmul.mubr.bf16.gmra.mxu0 %v1103
    %v1139 = vpop.f32.mrf.mxu0
    %v1140 = vadd.f32 0.0, %v1139
    %v1141 = vpop.f32.mrf.mxu0
    %v1142 = vpop.f32.mrf.mxu0
    %v1143 = vadd.f32 0.0, %v1142
    %v1144 = vpop.f32.mrf.mxu0
    %1145 = vdwg.mxu0
    %v1147 = vsel %vm965, %v1056, 0
    %1149 = vmatprep.subr.bf16.mxu0 0
    %1150 = vmatpush1.bf16.msra.mxu0 0
    %1151 = vmatprep.subr.bf16.mxu0 0
    %1152 = vmatpush1.bf16.msra.mxu0 0
    %1153 = vmatprep.subr.bf16.mxu0 0
    %1154 = vmatpush1.bf16.msra.mxu0 0
    %1155 = vmatprep.subr.bf16.mxu0 0
    %1156 = vmatpush1.bf16.msra.mxu0 0
    %1157 = vmatprep.subr.bf16.mxu0 0
    %1158 = vmatpush1.bf16.msra.mxu0 0
    %1159 = vmatprep.subr.bf16.mxu0 0
    %1160 = vmatpush1.bf16.msra.mxu0 0
    %1161 = vmatprep.subr.bf16.mxu0 0
    %1162 = vmatpush1.bf16.msra.mxu0 0
    %1163 = vmatprep.subr.bf16.mxu0 0
    %1164 = vmatpush1.bf16.msra.mxu0 %v772
    %1165 = vmatprep.subr.bf16.mxu0 0
    %1166 = vmatpush2.bf16.msra.mxu0 0
    %1167 = vmatprep.subr.bf16.mxu0 0
    %1168 = vmatpush2.bf16.msra.mxu0 0
    %1169 = vmatprep.subr.bf16.mxu0 0
    %1170 = vmatpush2.bf16.msra.mxu0 0
    %1171 = vmatprep.subr.bf16.mxu0 0
    %1172 = vmatpush2.bf16.msra.mxu0 0
    %1173 = vmatprep.subr.bf16.mxu0 0
    %1174 = vmatpush2.bf16.msra.mxu0 0
    %1175 = vmatprep.subr.bf16.mxu0 0
    %1176 = vmatpush2.bf16.msra.mxu0 0
    %1177 = vmatprep.subr.bf16.mxu0 0
    %1178 = vmatpush2.bf16.msra.mxu0 0
    %1179 = vmatprep.subr.bf16.mxu0 0
    %1180 = vmatpush2.bf16.msra.mxu0 0
    %1181 = vmatprep.mubr.bf16.mxu0 0
    %1182 = vmatmul.mubr.bf16.gmra.mxu0 %v1147
    %v1183 = vpop.f32.mrf.mxu0
    %v1184 = vadd.f32 0.0, %v1183
    %v1185 = vpop.f32.mrf.mxu0
    %v1186 = vpop.f32.mrf.mxu0
    %v1187 = vadd.f32 0.0, %v1186
    %v1188 = vpop.f32.mrf.mxu0
    %1189 = vdwg.mxu0
    %v1191 = vsel %vm965, %v1057, 0
    %1193 = vmatprep.subr.bf16.mxu0 0
    %1194 = vmatpush1.bf16.msra.mxu0 0
    %1195 = vmatprep.subr.bf16.mxu0 0
    %1196 = vmatpush1.bf16.msra.mxu0 0
    %1197 = vmatprep.subr.bf16.mxu0 0
    %1198 = vmatpush1.bf16.msra.mxu0 0
    %1199 = vmatprep.subr.bf16.mxu0 0
    %1200 = vmatpush1.bf16.msra.mxu0 0
    %1201 = vmatprep.subr.bf16.mxu0 0
    %1202 = vmatpush1.bf16.msra.mxu0 0
    %1203 = vmatprep.subr.bf16.mxu0 0
    %1204 = vmatpush1.bf16.msra.mxu0 0
    %1205 = vmatprep.subr.bf16.mxu0 0
    %1206 = vmatpush1.bf16.msra.mxu0 0
    %1207 = vmatprep.subr.bf16.mxu0 0
    %1208 = vmatpush1.bf16.msra.mxu0 %v773
    %1209 = vmatprep.subr.bf16.mxu0 0
    %1210 = vmatpush2.bf16.msra.mxu0 0
    %1211 = vmatprep.subr.bf16.mxu0 0
    %1212 = vmatpush2.bf16.msra.mxu0 0
    %1213 = vmatprep.subr.bf16.mxu0 0
    %1214 = vmatpush2.bf16.msra.mxu0 0
    %1215 = vmatprep.subr.bf16.mxu0 0
    %1216 = vmatpush2.bf16.msra.mxu0 0
    %1217 = vmatprep.subr.bf16.mxu0 0
    %1218 = vmatpush2.bf16.msra.mxu0 0
    %1219 = vmatprep.subr.bf16.mxu0 0
    %1220 = vmatpush2.bf16.msra.mxu0 0
    %1221 = vmatprep.subr.bf16.mxu0 0
    %1222 = vmatpush2.bf16.msra.mxu0 0
    %1223 = vmatprep.subr.bf16.mxu0 0
    %1224 = vmatpush2.bf16.msra.mxu0 0
    %1225 = vmatprep.mubr.bf16.mxu0 0
    %1226 = vmatmul.mubr.bf16.gmra.mxu0 %v1191
    %v1227 = vpop.f32.mrf.mxu0
    %v1228 = vadd.f32 0.0, %v1227
    %v1229 = vpop.f32.mrf.mxu0
    %v1230 = vpop.f32.mrf.mxu0
    %v1231 = vadd.f32 0.0, %v1230
    %v1232 = vpop.f32.mrf.mxu0
    %1233 = vdwg.mxu0
    %v1234 = vpack.c.bf16 %v1099, %v1096
    %v1235 = vpack.c.bf16 %v1143, %v1140
    %v1236 = vpack.c.bf16 %v1187, %v1184
    %v1237 = vpack.c.bf16 %v1231, %v1228
    %v1238 = vld [vmem:[%s3] sm:$0xf]
    %v1239 = vld [vmem:[%s3 + $0x4] sm:$0xf]
    %v1240 = vld [vmem:[%s3 + $0x8] sm:$0xf]
    %v1241 = vld [vmem:[%s3 + $0xc] sm:$0xf]
    %v1243 = vsel %vm776, %v1234, 0
    %vm1245 = vcmask 1043456
    %v1247 = vsel %vm1245, %v1238, 0
    %1249 = vmatprep.subr.bf16.mxu0 0
    %1250 = vmatpush1.bf16.msra.mxu0 0
    %1251 = vmatprep.subr.bf16.mxu0 0
    %1252 = vmatpush1.bf16.msra.mxu0 0
    %1253 = vmatprep.subr.bf16.mxu0 0
    %1254 = vmatpush1.bf16.msra.mxu0 0
    %1255 = vmatprep.subr.bf16.mxu0 0
    %1256 = vmatpush1.bf16.msra.mxu0 0
    %1257 = vmatprep.subr.bf16.mxu0 0
    %1258 = vmatpush1.bf16.msra.mxu0 0
    %1259 = vmatprep.subr.bf16.mxu0 0
    %1260 = vmatpush1.bf16.msra.mxu0 0
    %1261 = vmatprep.subr.bf16.mxu0 0
    %1262 = vmatpush1.bf16.msra.mxu0 0
    %1263 = vmatprep.subr.bf16.mxu0 0
    %1264 = vmatpush1.bf16.msra.mxu0 %v1247
    %1265 = vmatprep.subr.bf16.mxu0 0
    %1266 = vmatpush2.bf16.msra.mxu0 0
    %1267 = vmatprep.subr.bf16.mxu0 0
    %1268 = vmatpush2.bf16.msra.mxu0 0
    %1269 = vmatprep.subr.bf16.mxu0 0
    %1270 = vmatpush2.bf16.msra.mxu0 0
    %1271 = vmatprep.subr.bf16.mxu0 0
    %1272 = vmatpush2.bf16.msra.mxu0 0
    %1273 = vmatprep.subr.bf16.mxu0 0
    %1274 = vmatpush2.bf16.msra.mxu0 0
    %1275 = vmatprep.subr.bf16.mxu0 0
    %1276 = vmatpush2.bf16.msra.mxu0 0
    %1277 = vmatprep.subr.bf16.mxu0 0
    %1278 = vmatpush2.bf16.msra.mxu0 0
    %1279 = vmatprep.subr.bf16.mxu0 0
    %1280 = vmatpush2.bf16.msra.mxu0 0
    %1281 = vmatprep.mubr.bf16.mxu0 0
    %1282 = vmatmul.mubr.bf16.gmra.mxu0 %v1243
    %v1283 = vpop.f32.mrf.mxu0
    %v1284 = vadd.f32 0.0, %v1283
    %v1285 = vpop.f32.mrf.mxu0
    %v1286 = vpop.f32.mrf.mxu0
    %v1287 = vadd.f32 0.0, %v1286
    %v1288 = vpop.f32.mrf.mxu0
    %1289 = vdwg.mxu0
    %v1291 = vsel %vm776, %v1235, 0
    %v1294 = vsel %vm1245, %v1239, 0
    %1296 = vmatprep.subr.bf16.mxu0 0
    %1297 = vmatpush1.bf16.msra.mxu0 0
    %1298 = vmatprep.subr.bf16.mxu0 0
    %1299 = vmatpush1.bf16.msra.mxu0 0
    %1300 = vmatprep.subr.bf16.mxu0 0
    %1301 = vmatpush1.bf16.msra.mxu0 0
    %1302 = vmatprep.subr.bf16.mxu0 0
    %1303 = vmatpush1.bf16.msra.mxu0 0
    %1304 = vmatprep.subr.bf16.mxu0 0
    %1305 = vmatpush1.bf16.msra.mxu0 0
    %1306 = vmatprep.subr.bf16.mxu0 0
    %1307 = vmatpush1.bf16.msra.mxu0 0
    %1308 = vmatprep.subr.bf16.mxu0 0
    %1309 = vmatpush1.bf16.msra.mxu0 0
    %1310 = vmatprep.subr.bf16.mxu0 0
    %1311 = vmatpush1.bf16.msra.mxu0 %v1294
    %1312 = vmatprep.subr.bf16.mxu0 0
    %1313 = vmatpush2.bf16.msra.mxu0 0
    %1314 = vmatprep.subr.bf16.mxu0 0
    %1315 = vmatpush2.bf16.msra.mxu0 0
    %1316 = vmatprep.subr.bf16.mxu0 0
    %1317 = vmatpush2.bf16.msra.mxu0 0
    %1318 = vmatprep.subr.bf16.mxu0 0
    %1319 = vmatpush2.bf16.msra.mxu0 0
    %1320 = vmatprep.subr.bf16.mxu0 0
    %1321 = vmatpush2.bf16.msra.mxu0 0
    %1322 = vmatprep.subr.bf16.mxu0 0
    %1323 = vmatpush2.bf16.msra.mxu0 0
    %1324 = vmatprep.subr.bf16.mxu0 0
    %1325 = vmatpush2.bf16.msra.mxu0 0
    %1326 = vmatprep.subr.bf16.mxu0 0
    %1327 = vmatpush2.bf16.msra.mxu0 0
    %1328 = vmatprep.mubr.bf16.mxu0 0
    %1329 = vmatmul.mubr.bf16.gmra.mxu0 %v1291
    %v1330 = vpop.f32.mrf.mxu0
    %v1331 = vadd.f32 0.0, %v1330
    %v1332 = vpop.f32.mrf.mxu0
    %v1333 = vpop.f32.mrf.mxu0
    %v1334 = vadd.f32 0.0, %v1333
    %v1335 = vpop.f32.mrf.mxu0
    %1336 = vdwg.mxu0
    %v1338 = vsel %vm776, %v1236, 0
    %v1341 = vsel %vm1245, %v1240, 0
    %1343 = vmatprep.subr.bf16.mxu0 0
    %1344 = vmatpush1.bf16.msra.mxu0 0
    %1345 = vmatprep.subr.bf16.mxu0 0
    %1346 = vmatpush1.bf16.msra.mxu0 0
    %1347 = vmatprep.subr.bf16.mxu0 0
    %1348 = vmatpush1.bf16.msra.mxu0 0
    %1349 = vmatprep.subr.bf16.mxu0 0
    %1350 = vmatpush1.bf16.msra.mxu0 0
    %1351 = vmatprep.subr.bf16.mxu0 0
    %1352 = vmatpush1.bf16.msra.mxu0 0
    %1353 = vmatprep.subr.bf16.mxu0 0
    %1354 = vmatpush1.bf16.msra.mxu0 0
    %1355 = vmatprep.subr.bf16.mxu0 0
    %1356 = vmatpush1.bf16.msra.mxu0 0
    %1357 = vmatprep.subr.bf16.mxu0 0
    %1358 = vmatpush1.bf16.msra.mxu0 %v1341
    %1359 = vmatprep.subr.bf16.mxu0 0
    %1360 = vmatpush2.bf16.msra.mxu0 0
    %1361 = vmatprep.subr.bf16.mxu0 0
    %1362 = vmatpush2.bf16.msra.mxu0 0
    %1363 = vmatprep.subr.bf16.mxu0 0
    %1364 = vmatpush2.bf16.msra.mxu0 0
    %1365 = vmatprep.subr.bf16.mxu0 0
    %1366 = vmatpush2.bf16.msra.mxu0 0
    %1367 = vmatprep.subr.bf16.mxu0 0
    %1368 = vmatpush2.bf16.msra.mxu0 0
    %1369 = vmatprep.subr.bf16.mxu0 0
    %1370 = vmatpush2.bf16.msra.mxu0 0
    %1371 = vmatprep.subr.bf16.mxu0 0
    %1372 = vmatpush2.bf16.msra.mxu0 0
    %1373 = vmatprep.subr.bf16.mxu0 0
    %1374 = vmatpush2.bf16.msra.mxu0 0
    %1375 = vmatprep.mubr.bf16.mxu0 0
    %1376 = vmatmul.mubr.bf16.gmra.mxu0 %v1338
    %v1377 = vpop.f32.mrf.mxu0
    %v1378 = vadd.f32 0.0, %v1377
    %v1379 = vpop.f32.mrf.mxu0
    %v1380 = vpop.f32.mrf.mxu0
    %v1381 = vadd.f32 0.0, %v1380
    %v1382 = vpop.f32.mrf.mxu0
    %1383 = vdwg.mxu0
    %v1385 = vsel %vm776, %v1237, 0
    %v1388 = vsel %vm1245, %v1241, 0
    %1390 = vmatprep.subr.bf16.mxu0 0
    %1391 = vmatpush1.bf16.msra.mxu0 0
    %1392 = vmatprep.subr.bf16.mxu0 0
    %1393 = vmatpush1.bf16.msra.mxu0 0
    %1394 = vmatprep.subr.bf16.mxu0 0
    %1395 = vmatpush1.bf16.msra.mxu0 0
    %1396 = vmatprep.subr.bf16.mxu0 0
    %1397 = vmatpush1.bf16.msra.mxu0 0
    %1398 = vmatprep.subr.bf16.mxu0 0
    %1399 = vmatpush1.bf16.msra.mxu0 0
    %1400 = vmatprep.subr.bf16.mxu0 0
    %1401 = vmatpush1.bf16.msra.mxu0 0
    %1402 = vmatprep.subr.bf16.mxu0 0
    %1403 = vmatpush1.bf16.msra.mxu0 0
    %1404 = vmatprep.subr.bf16.mxu0 0
    %1405 = vmatpush1.bf16.msra.mxu0 %v1388
    %1406 = vmatprep.subr.bf16.mxu0 0
    %1407 = vmatpush2.bf16.msra.mxu0 0
    %1408 = vmatprep.subr.bf16.mxu0 0
    %1409 = vmatpush2.bf16.msra.mxu0 0
    %1410 = vmatprep.subr.bf16.mxu0 0
    %1411 = vmatpush2.bf16.msra.mxu0 0
    %1412 = vmatprep.subr.bf16.mxu0 0
    %1413 = vmatpush2.bf16.msra.mxu0 0
    %1414 = vmatprep.subr.bf16.mxu0 0
    %1415 = vmatpush2.bf16.msra.mxu0 0
    %1416 = vmatprep.subr.bf16.mxu0 0
    %1417 = vmatpush2.bf16.msra.mxu0 0
    %1418 = vmatprep.subr.bf16.mxu0 0
    %1419 = vmatpush2.bf16.msra.mxu0 0
    %1420 = vmatprep.subr.bf16.mxu0 0
    %1421 = vmatpush2.bf16.msra.mxu0 0
    %1422 = vmatprep.mubr.bf16.mxu0 0
    %1423 = vmatmul.mubr.bf16.gmra.mxu0 %v1385
    %v1424 = vpop.f32.mrf.mxu0
    %v1425 = vadd.f32 0.0, %v1424
    %v1426 = vpop.f32.mrf.mxu0
    %v1427 = vpop.f32.mrf.mxu0
    %v1428 = vadd.f32 0.0, %v1427
    %v1429 = vpop.f32.mrf.mxu0
    %1430 = vdwg.mxu0
    %v1431 = vadd.f32 %v1284, %v1331
    %v1432 = vadd.f32 %v1287, %v1334
    %v1433 = vadd.f32 %v1431, %v1378
    %v1434 = vadd.f32 %v1432, %v1381
    %v1435 = vadd.f32 %v1433, %v1425
    %v1436 = vadd.f32 %v1434, %v1428
    %v1437 = vlaneseq
    %v1438 = vshrl.u32 %v1437, 7
    %v1439 = vsub.s32 4, %v1438
    %v1440 = vrot.slane %v33, %v1439
    %v1441 = vadd.f32 %v1435, %v1440
    %v1442 = vadd.f32 %v1436, %v1440
    %v1443 = vadd.f32 %v31, %v1441
    %v1444 = vadd.f32 %v32, %v1442
    %v1445 = vsel %vm34, %v1443, 0.0
    %1446 = vadd.xlane.f32.xlu0 %v1445
    %v1447 = vpop.xlane.xlu0 %1446
    %v1448 = vsel %vm34, %v1444, 0.0
    %1449 = vadd.xlane.f32.xlu0 %v1448
    %v1450 = vpop.xlane.xlu0 %1449
    %v1451 = vmul.f32 %v1447, %v41
    %v1452 = vmul.f32 %v1450, %v41
    %v1453 = vsub.f32 %v1443, %v1451
    %v1454 = vsub.f32 %v1444, %v1452
    %v1455 = vmul.f32 %v1453, %v1453
    %v1456 = vmul.f32 %v1454, %v1454
    %v1457 = vsel %vm34, %v1455, 0.0
    %1458 = vadd.xlane.f32.xlu0 %v1457
    %v1459 = vpop.xlane.xlu0 %1458
    %v1460 = vsel %vm34, %v1456, 0.0
    %1461 = vadd.xlane.f32.xlu0 %v1460
    %v1462 = vpop.xlane.xlu0 %1461
    %v1463 = vmul.f32 %v1459, %v41
    %v1464 = vmul.f32 %v1462, %v41
    %v1465 = vadd.f32 %v1463, 1e-05
    %v1466 = vadd.f32 %v1464, 1e-05
    %v1467 = vrsqrt.pop %v1465
    %v1468 = vrsqrt.pop %v1466
    %v1469 = vmul.f32 %v1453, %v1467
    %v1470 = vmul.f32 %v1454, %v1468
    %v1471 = vlaneseq
    %v1472 = vshrl.u32 %v1471, 7
    %v1473 = vsub.s32 2, %v1472
    %v1474 = vrot.slane %v33, %v1473
    %v1475 = vmul.f32 %v1469, %v1474
    %v1476 = vmul.f32 %v1470, %v1474
    %v1477 = vlaneseq
    %v1478 = vshrl.u32 %v1477, 7
    %v1479 = vsub.s32 3, %v1478
    %v1480 = vrot.slane %v33, %v1479
    %v1481 = vadd.f32 %v1475, %v1480
    %v1482 = vadd.f32 %v1476, %v1480
    %v1483 = vpack.c.bf16 %v1482, %v1481
    %v1484 = vld [vmem:[%s4] sm:$0xf]
    %v1485 = vld [vmem:[%s4 + $0x4] sm:$0xf]
    %v1486 = vld [vmem:[%s4 + $0x8] sm:$0xf]
    %v1487 = vld [vmem:[%s4 + $0xc] sm:$0xf]
    %v1488 = vld [vmem:[%s5] sm:$0x1]
    %v1490 = vlaneseq
    %v1491 = vshrl.u32 %v1490, 7
    %v1492 = vsub.s32 0, %v1491
    %v1493 = vrot.slane %v1488, %v1492
    %v1499 = vunpack.c.l.b16 %v1484
    %v1500 = vunpack.c.l.b16 %v1485
    %v1501 = vunpack.c.l.b16 %v1486
    %v1502 = vunpack.c.l.b16 %v1487
    %v1503 = vpack.c.b16 %v1500, %v1499
    %v1504 = vpack.c.b16 %v1502, %v1501
    %v1508 = vsel %vm34, %v1483, 0
    %1510 = vmatprep.subr.bf16.mxu0 0
    %1511 = vmatpush1.bf16.msra.mxu0 0
    %1512 = vmatprep.subr.bf16.mxu0 0
    %1513 = vmatpush1.bf16.msra.mxu0 0
    %1514 = vmatprep.subr.bf16.mxu0 0
    %1515 = vmatpush1.bf16.msra.mxu0 0
    %1516 = vmatprep.subr.bf16.mxu0 0
    %1517 = vmatpush1.bf16.msra.mxu0 0
    %1518 = vmatprep.subr.bf16.mxu0 0
    %1519 = vmatpush1.bf16.msra.mxu0 0
    %1520 = vmatprep.subr.bf16.mxu0 0
    %1521 = vmatpush1.bf16.msra.mxu0 0
    %1522 = vmatprep.subr.bf16.mxu0 0
    %1523 = vmatpush1.bf16.msra.mxu0 %v1504
    %1524 = vmatprep.subr.bf16.mxu0 0
    %1525 = vmatpush1.bf16.msra.mxu0 %v1503
    %1526 = vmatprep.subr.bf16.mxu0 0
    %1527 = vmatpush2.bf16.msra.mxu0 0
    %1528 = vmatprep.subr.bf16.mxu0 0
    %1529 = vmatpush2.bf16.msra.mxu0 0
    %1530 = vmatprep.subr.bf16.mxu0 0
    %1531 = vmatpush2.bf16.msra.mxu0 0
    %1532 = vmatprep.subr.bf16.mxu0 0
    %1533 = vmatpush2.bf16.msra.mxu0 0
    %1534 = vmatprep.subr.bf16.mxu0 0
    %1535 = vmatpush2.bf16.msra.mxu0 0
    %1536 = vmatprep.subr.bf16.mxu0 0
    %1537 = vmatpush2.bf16.msra.mxu0 0
    %1538 = vmatprep.subr.bf16.mxu0 0
    %1539 = vmatpush2.bf16.msra.mxu0 0
    %1540 = vmatprep.subr.bf16.mxu0 0
    %1541 = vmatpush2.bf16.msra.mxu0 0
    %1542 = vmatprep.mubr.bf16.mxu0 0
    %1543 = vmatmul.mubr.bf16.gmra.mxu0 %v1508
    %v1544 = vpop.f32.mrf.mxu0
    %v1545 = vadd.f32 %v1493, %v1544
    %v1546 = vpop.f32.mrf.mxu0
    %v1547 = vpop.f32.mrf.mxu0
    %v1548 = vadd.f32 %v1493, %v1547
    %v1549 = vpop.f32.mrf.mxu0
    %1550 = vdwg.mxu0
    %v1551 = vmul.f32 %v1545, 0.5
    %v1552 = vmul.f32 %v1548, 0.5
    %v1553 = vmul.f32 %v1545, 0.044715
    %v1554 = vmul.f32 %v1548, 0.044715
    %v1555 = vmul.f32 %v1553, %v1545
    %v1556 = vmul.f32 %v1554, %v1548
    %v1557 = vmul.f32 %v1555, %v1545
    %v1558 = vmul.f32 %v1556, %v1548
    %v1559 = vadd.f32 %v1545, %v1557
    %v1560 = vadd.f32 %v1548, %v1558
    %v1561 = vmul.f32 %v1559, 0.7978846
    %v1562 = vmul.f32 %v1560, 0.7978846
    %v1563 = vtanh.pop %v1561
    %v1564 = vtanh.pop %v1562
    %v1565 = vadd.f32 %v1563, 1.0
    %v1566 = vadd.f32 %v1564, 1.0
    %v1567 = vmul.f32 %v1551, %v1565
    %v1568 = vmul.f32 %v1552, %v1566
    %v1569 = vpack.c.bf16 %v1568, %v1567
    %v1570 = vld [vmem:[%s6] sm:$0xf]
    %v1571 = vld [vmem:[%s6 + $0x4] sm:$0xf]
    %v1572 = vld [vmem:[%s6 + $0x8] sm:$0xf]
    %v1573 = vld [vmem:[%s6 + $0xc] sm:$0xf]
    %v1574 = vld [vmem:[%s6 + $0x10] sm:$0xf]
    %v1575 = vld [vmem:[%s6 + $0x14] sm:$0xf]
    %v1576 = vld [vmem:[%s6 + $0x18] sm:$0xf]
    %v1577 = vld [vmem:[%s6 + $0x1c] sm:$0xf]
    %v1578 = vld [vmem:[%s6 + $0x20] sm:$0xf]
    %v1579 = vld [vmem:[%s6 + $0x24] sm:$0xf]
    %v1580 = vld [vmem:[%s6 + $0x28] sm:$0xf]
    %v1581 = vld [vmem:[%s6 + $0x2c] sm:$0xf]
    %v1582 = vld [vmem:[%s6 + $0x30] sm:$0xf]
    %v1583 = vld [vmem:[%s6 + $0x34] sm:$0xf]
    %v1584 = vld [vmem:[%s6 + $0x38] sm:$0xf]
    %v1585 = vld [vmem:[%s6 + $0x3c] sm:$0xf]
    %v1586 = vlaneseq
    %v1587 = vshrl.u32 %v1586, 7
    %v1588 = vsub.s32 5, %v1587
    %v1589 = vrot.slane %v33, %v1588
    %v1606 = vunpack.c.l.b16 %v1570
    %v1607 = vunpack.c.l.b16 %v1571
    %v1608 = vunpack.c.l.b16 %v1572
    %v1609 = vunpack.c.l.b16 %v1573
    %v1610 = vunpack.c.l.b16 %v1574
    %v1611 = vunpack.c.l.b16 %v1575
    %v1612 = vunpack.c.l.b16 %v1576
    %v1613 = vunpack.c.l.b16 %v1577
    %v1614 = vunpack.c.l.b16 %v1578
    %v1615 = vunpack.c.l.b16 %v1579
    %v1616 = vunpack.c.l.b16 %v1580
    %v1617 = vunpack.c.l.b16 %v1581
    %v1618 = vunpack.c.l.b16 %v1582
    %v1619 = vunpack.c.l.b16 %v1583
    %v1620 = vunpack.c.l.b16 %v1584
    %v1621 = vunpack.c.l.b16 %v1585
    %v1622 = vpack.c.b16 %v1607, %v1606
    %v1623 = vpack.c.b16 %v1609, %v1608
    %v1624 = vpack.c.b16 %v1611, %v1610
    %v1625 = vpack.c.b16 %v1613, %v1612
    %v1626 = vpack.c.b16 %v1615, %v1614
    %v1627 = vpack.c.b16 %v1617, %v1616
    %v1628 = vpack.c.b16 %v1619, %v1618
    %v1629 = vpack.c.b16 %v1621, %v1620
    %1638 = vmatprep.subr.bf16.mxu0 0
    %1639 = vmatpush1.bf16.msra.mxu0 %v1629
    %1640 = vmatprep.subr.bf16.mxu0 0
    %1641 = vmatpush1.bf16.msra.mxu0 %v1628
    %1642 = vmatprep.subr.bf16.mxu0 0
    %1643 = vmatpush1.bf16.msra.mxu0 %v1627
    %1644 = vmatprep.subr.bf16.mxu0 0
    %1645 = vmatpush1.bf16.msra.mxu0 %v1626
    %1646 = vmatprep.subr.bf16.mxu0 0
    %1647 = vmatpush1.bf16.msra.mxu0 %v1625
    %1648 = vmatprep.subr.bf16.mxu0 0
    %1649 = vmatpush1.bf16.msra.mxu0 %v1624
    %1650 = vmatprep.subr.bf16.mxu0 0
    %1651 = vmatpush1.bf16.msra.mxu0 %v1623
    %1652 = vmatprep.subr.bf16.mxu0 0
    %1653 = vmatpush1.bf16.msra.mxu0 %v1622
    %1654 = vmatprep.subr.bf16.mxu0 0
    %1655 = vmatpush2.bf16.msra.mxu0 0
    %1656 = vmatprep.subr.bf16.mxu0 0
    %1657 = vmatpush2.bf16.msra.mxu0 0
    %1658 = vmatprep.subr.bf16.mxu0 0
    %1659 = vmatpush2.bf16.msra.mxu0 0
    %1660 = vmatprep.subr.bf16.mxu0 0
    %1661 = vmatpush2.bf16.msra.mxu0 0
    %1662 = vmatprep.subr.bf16.mxu0 0
    %1663 = vmatpush2.bf16.msra.mxu0 0
    %1664 = vmatprep.subr.bf16.mxu0 0
    %1665 = vmatpush2.bf16.msra.mxu0 0
    %1666 = vmatprep.subr.bf16.mxu0 0
    %1667 = vmatpush2.bf16.msra.mxu0 0
    %1668 = vmatprep.subr.bf16.mxu0 0
    %1669 = vmatpush2.bf16.msra.mxu0 0
    %1670 = vmatprep.mubr.bf16.mxu0 0
    %1671 = vmatmul.mubr.bf16.gmra.mxu0 %v1569
    %v1672 = vpop.f32.mrf.mxu0
    %v1673 = vadd.f32 %v1589, %v1672
    %v1674 = vpop.f32.mrf.mxu0
    %v1675 = vpop.f32.mrf.mxu0
    %v1676 = vadd.f32 %v1589, %v1675
    %v1677 = vpop.f32.mrf.mxu0
    %1678 = vdwg.mxu0
    %v1679 = vadd.f32 %v1443, %v1673
    %v1680 = vadd.f32 %v1444, %v1676
    %1681 = vst.msk [vmem:[#allocation2] sm:$0xff] %vm34, %v1679
    %1682 = vst.msk [vmem:[#allocation2 + $0x8] sm:$0xff] %vm34, %v1680
    // Predicated region
    $region34: #{transformer_block.1} parent=1 // pred_check
      _
    $region35: #{transformer_block.1} parent=1 // pred_check_branch
      %1684 = sbr.rel (0) target = $region37
    $region36: #{transformer_block.1} parent=1 // pred_region
      %s1686 = ssub.s32 256, 256
      %1687 = vsyncadd [#allocation3], %s1686
      %s1688 = sshll.u32 [#allocation2], 4
      %s1689 = int_to_ptr.vmem [resolvable:$true] %s1688
      %1694 = dma.vmem_to_hbm [thread:$0]  %s1689, 256, %s8, [#allocation3], 128, 128, 8
    $region37: #{transformer_block.1} parent=1 // pred_fallthru
      _
    // Predicated region
    $region38: #{transformer_block.1} parent=1 // pred_check
      _
    $region39: #{transformer_block.1} parent=1 // pred_check_branch
      %1696 = sbr.rel (0) target = $region41
    $region40: #{transformer_block.1} parent=1 // pred_region
      %1697 = dma.done [#allocation3], 256
    $region41: #{transformer_block.1} parent=1 // pred_fallthru
      _
    %1698 = vsyncpa [#allocation3], 1

</llo_original>
